<compile_context>
chip_gen: v7x
topology: tpu7x:2x2x1
jax: 0.10.0
libtpu: 0.0.40
codegen_flags: <defaults>
</compile_context>

<pallas_src>
import functools
import math

import jax
import jax.numpy as jnp
import numpy as np
from jax import lax
from jax.experimental import pallas as pl
from jax.experimental.pallas import tpu as pltpu


def _layernorm(v, g, b, eps):
    mu = jnp.mean(v, axis=-1, keepdims=True)
    var = jnp.mean((v - mu) ** 2, axis=-1, keepdims=True)
    return (v - mu) * lax.rsqrt(var + eps) * g + b


def transformer_block_kernel(
    x_ref,                            # (Bblk, S, E)
    ln_attn_g_ref, ln_attn_b_ref,     # (1, E)
    in_w_ref, in_b_ref,               # (E, 3E) bf16 (q-scale folded), (1, 3E) f32
    out_w_ref, out_b_ref,             # (E, E) bf16, (1, E) f32
    ln_mlp_g_ref, ln_mlp_b_ref,       # TransformerBlock.norm_mlp
    mlp_norm_g_ref, mlp_norm_b_ref,   # MLPBlock.norm
    w1_ref, b1_ref,                   # (E, M) bf16, (1, M) f32
    w2_ref, b2_ref,                   # (M, E) bf16, (1, E) f32
    o_ref,                            # (Bblk, S, E)
    qkv_scr,                          # VMEM (Bblk, S, 3E) bf16
    ctx_scr,                          # VMEM (Bblk, S, E) bf16
    *, num_heads, eps, s_valid,
):
    Bblk, S, E = x_ref.shape
    H = num_heads
    Dh = E // H
    R = Bblk * S

    # ---- hoisted one-time loads of small vectors ------------------------------
    ln_attn_g = ln_attn_g_ref[...]
    ln_attn_b = ln_attn_b_ref[...]
    ln_mlp_g = ln_mlp_g_ref[...]
    ln_mlp_b = ln_mlp_b_ref[...]
    mlp_norm_g = mlp_norm_g_ref[...]
    mlp_norm_b = mlp_norm_b_ref[...]
    in_b = in_b_ref[...]
    out_b = out_b_ref[...]
    b1 = b1_ref[...]
    b2 = b2_ref[...]

    # ---- pre-attention LayerNorm + QKV projection (whole slab) ----------------
    x2 = x_ref[...].astype(jnp.float32).reshape(R, E)
    n1 = _layernorm(x2, ln_attn_g, ln_attn_b, eps)
    qkv = jnp.dot(n1.astype(jnp.bfloat16), in_w_ref[...],
                  preferred_element_type=jnp.float32) + in_b          # (R, 3E) f32
    qkv_scr[...] = qkv.reshape(Bblk, S, 3 * E).astype(jnp.bfloat16)

    # key mask only needed when the wrapper padded the sequence
    if s_valid < S:
        key_keep = lax.broadcasted_iota(jnp.int32, (S, S), 1) < s_valid
    else:
        key_keep = None

    # ---- multi-head self-attention: bounded batch loop, unrolled head loop ----
    @pl.loop(0, Bblk)
    def _(b):
        for h in range(H):                        # static, small (H heads)
            c0 = h * Dh
            # NOTE: sub-128-lane head slices; acceptable given one big out-proj.
            qh = qkv_scr[b, :, c0:c0 + Dh]
            kh = qkv_scr[b, :, E + c0:E + c0 + Dh]
            vh = qkv_scr[b, :, 2 * E + c0:2 * E + c0 + Dh]
            s = lax.dot_general(qh, kh,
                                dimension_numbers=(((1,), (1,)), ((), ())),
                                preferred_element_type=jnp.float32)   # (S, S)
            if key_keep is not None:
                s = jnp.where(key_keep, s, jnp.float32(-1e30))
            s = s - jnp.max(s, axis=-1, keepdims=True)
            p = jnp.exp(s)
            p = p * pl.reciprocal(jnp.sum(p, axis=-1, keepdims=True), approx=True)
            ctx = jnp.dot(p.astype(jnp.bfloat16), vh,
                          preferred_element_type=jnp.float32)         # (S, Dh)
            ctx_scr[b, :, c0:c0 + Dh] = ctx.astype(jnp.bfloat16)

    # single full-depth out-projection for the whole slab + residual 1
    attn = (jnp.dot(ctx_scr[...].reshape(R, E), out_w_ref[...],
                    preferred_element_type=jnp.float32) + out_b + x2)  # (R, E)

    # ---- MLP branch: norm_mlp -> MLPBlock.norm -> Linear -> GELU -> Linear ----
    hdn = _layernorm(attn, ln_mlp_g, ln_mlp_b, eps)
    hdn = _layernorm(hdn, mlp_norm_g, mlp_norm_b, eps)
    h1 = jnp.dot(hdn.astype(jnp.bfloat16), w1_ref[...],
                 preferred_element_type=jnp.float32) + b1              # (R, M)
    # exact (erf-based) GELU, matching torch.nn.GELU default
    h1 = 0.5 * h1 * (1.0 + lax.erf(h1 * np.float32(1.0 / math.sqrt(2.0))))
    # Dropout(p=0.1) is identity at inference time.
    h2 = jnp.dot(h1.astype(jnp.bfloat16), w2_ref[...],
                 preferred_element_type=jnp.float32) + b2              # (R, E)

    o_ref[...] = (h2 + attn).reshape(Bblk, S, E).astype(o_ref.dtype)   # residual 2


# ---------------------------- wrapper / sizing policy ---------------------------

def _vmem_capacity_bytes():
    try:
        return int(pltpu.get_tpu_info().vmem_capacity_bytes)
    except Exception:
        return 64 << 20   # conservative default (v7x per-core VMEM)


def _estimate_vmem_bytes(block_b, S, E, M):
    bf16, f32 = 2, 4
    R = block_b * S
    weights = (E * 3 * E + E * E + E * M + M * E) * bf16      # single-buffered
    vectors = (3 * E + 8 * E + M) * f32                       # biases + LN params
    io = 2 * 2 * R * E * f32                                  # double-buffered in/out
    scratch = R * 3 * E * bf16 + R * E * bf16                 # qkv + ctx scratch
    acts = R * (6 * E * f32 + M * (f32 + bf16))               # n1/qkv/attn/hdn/h2 + h1
    return weights + vectors + io + scratch + acts


def _pick_block_b(B, S, E, M, budget):
    cands = [d for d in (8, 4, 2, 1) if B % d == 0]
    multi = [d for d in cands if B // d >= 2]   # keep >=2 grid steps (megacore)
    if multi:
        cands = multi
    for d in cands:                              # largest block that fits VMEM budget
        if _estimate_vmem_bytes(d, S, E, M) <= budget:
            return d
    return cands[-1]


def transformer_block(x, kparams, *, num_heads, eps=1e-12, block_b=None):
    """x: (B, S, E). kparams: output of prepare_kernel_params."""
    B, S0, E = x.shape
    M = kparams["w1"].shape[1]
    assert E % num_heads == 0

    # pad sequence to a multiple of 8 (sublane alignment); padded keys are masked
    S = ((S0 + 7) // 8) * 8
    xp = x if S == S0 else jnp.pad(x, ((0, 0), (0, S - S0), (0, 0)))

    cap = _vmem_capacity_bytes()
    if block_b is None:
        block_b = _pick_block_b(B, S, E, M, int(0.8 * cap))
    assert B % block_b == 0
    vmem_limit = int(min(0.85 * cap,
                         max(2 * _estimate_vmem_bytes(block_b, S, E, M), 32 << 20)))

    def const_spec(shape):
        imap = lambda g: (0,) * len(shape)
        try:   # single-buffer constant (revisited) blocks to halve their VMEM
            return pl.BlockSpec(shape, imap, pipeline_mode=pl.Buffered(1))
        except TypeError:
            return pl.BlockSpec(shape, imap)

    kernel = functools.partial(transformer_block_kernel,
                               num_heads=num_heads, eps=eps, s_valid=S0)

    flops = 2 * B * S * (3 * E * E + E * E + 2 * E * M) + 4 * B * S * S * E
    transcendentals = B * S * (S * num_heads + M)
    bytes_accessed = 2 * B * S * E * 4 + (3 * E * E + E * E + 2 * E * M) * 2
    try:
        cost = pl.CostEstimate(flops=int(flops),
                               transcendentals=int(transcendentals),
                               bytes_accessed=int(bytes_accessed))
    except Exception:
        cost = None

    out = pl.pallas_call(
        kernel,
        out_shape=jax.ShapeDtypeStruct((B, S, E), x.dtype),
        grid_spec=pltpu.PrefetchScalarGridSpec(
            num_scalar_prefetch=0,
            grid=(B // block_b,),
            in_specs=[
                pl.BlockSpec((block_b, S, E), lambda g: (g, 0, 0)),   # x
                const_spec((1, E)), const_spec((1, E)),               # ln_attn g, b
                const_spec((E, 3 * E)), const_spec((1, 3 * E)),       # in_proj W^T, b
                const_spec((E, E)), const_spec((1, E)),               # out_proj W^T, b
                const_spec((1, E)), const_spec((1, E)),               # norm_mlp g, b
                const_spec((1, E)), const_spec((1, E)),               # MLPBlock.norm g, b
                const_spec((E, M)), const_spec((1, M)),               # linear1 W^T, b
                const_spec((M, E)), const_spec((1, E)),               # linear2 W^T, b
            ],
            out_specs=pl.BlockSpec((block_b, S, E), lambda g: (g, 0, 0)),
            scratch_shapes=[
                pltpu.VMEM((block_b, S, 3 * E), jnp.bfloat16),        # qkv scratch
                pltpu.VMEM((block_b, S, E), jnp.bfloat16),            # ctx scratch
            ],
        ),
        compiler_params=pltpu.CompilerParams(
            dimension_semantics=("parallel",),   # batch steps are independent
            vmem_limit_bytes=vmem_limit,
        ),
        cost_estimate=cost,
    )(
        xp,
        kparams["ln_attn_g"], kparams["ln_attn_b"],
        kparams["in_w"], kparams["in_b"],
        kparams["out_w"], kparams["out_b"],
        kparams["ln_mlp_g"], kparams["ln_mlp_b"],
        kparams["mlp_norm_g"], kparams["mlp_norm_b"],
        kparams["w1"], kparams["b1"],
        kparams["w2"], kparams["b2"],
    )
    if S != S0:
        out = out[:, :S0, :]
    return out


def prepare_kernel_params(params, *, num_heads):
    """One-time host-side transform: fold 1/sqrt(Dh) into the q slice of the
    in_proj weight/bias and cast matmul weights to bf16 for the MXU."""
    E = params["out_w"].shape[0]
    Dh = E // num_heads
    scale = np.float32(1.0 / math.sqrt(Dh))
    in_w = params["in_w"].astype(jnp.float32).at[:, :E].multiply(scale)
    in_b = params["in_b"].astype(jnp.float32).at[:, :E].multiply(scale)
    kp = dict(params)
    kp["in_w"] = in_w.astype(jnp.bfloat16)
    kp["in_b"] = in_b
    kp["out_w"] = params["out_w"].astype(jnp.bfloat16)
    kp["w1"] = params["w1"].astype(jnp.bfloat16)
    kp["w2"] = params["w2"].astype(jnp.bfloat16)
    return kp


def reference_block(x, params, *, num_heads, eps=1e-12):
    """Pure-JAX f32 reference of the same forward pass (sanity check)."""
    B, S, E = x.shape
    Dh = E // num_heads

    def ln(v, g, b):
        mu = jnp.mean(v, axis=-1, keepdims=True)
        var = jnp.mean((v - mu) ** 2, axis=-1, keepdims=True)
        return (v - mu) / jnp.sqrt(var + eps) * g + b

    n1 = ln(x, params["ln_attn_g"], params["ln_attn_b"])
    qkv = n1 @ params["in_w"] + params["in_b"]
    q, k, v = jnp.split(qkv, 3, axis=-1)
    q = q.reshape(B, S, num_heads, Dh).transpose(0, 2, 1, 3)
    k = k.reshape(B, S, num_heads, Dh).transpose(0, 2, 1, 3)
    v = v.reshape(B, S, num_heads, Dh).transpose(0, 2, 1, 3)
    s = jnp.einsum("bhqd,bhkd->bhqk", q / np.sqrt(Dh), k)
    p = jax.nn.softmax(s, axis=-1)
    ctx = jnp.einsum("bhqk,bhkd->bhqd", p, v).transpose(0, 2, 1, 3).reshape(B, S, E)
    attn = ctx @ params["out_w"] + params["out_b"] + x
    h = ln(attn, params["ln_mlp_g"], params["ln_mlp_b"])
    h = ln(h, params["mlp_norm_g"], params["mlp_norm_b"])
    h = h @ params["w1"] + params["b1"]
    h = 0.5 * h * (1.0 + lax.erf(h / np.sqrt(2.0)))
    h = h @ params["w2"] + params["b2"]
    return h + attn


def init_params(key, embed_dim, mlp_dim):
    E, M = embed_dim, mlp_dim
    ks = jax.random.split(key, 4)
    std = 0.02
    # PyTorch shapes, pre-transposed for right-multiplication in the kernel.
    in_proj_w = jax.random.normal(ks[0], (3 * E, E), jnp.float32) * std   # (3E, E)
    out_proj_w = jax.random.normal(ks[1], (E, E), jnp.float32) * std      # (E, E)
    lin1_w = jax.random.normal(ks[2], (M, E), jnp.float32) * std          # (M, E)
    lin2_w = jax.random.normal(ks[3], (E, M), jnp.float32) * std          # (E, M)
    return {
        "ln_attn_g": jnp.ones((1, E), jnp.float32),
        "ln_attn_b": jnp.zeros((1, E), jnp.float32),
        "in_w": in_proj_w.T,                           # (E, 3E)
        "in_b": jnp.zeros((1, 3 * E), jnp.float32),
        "out_w": out_proj_w.T,                         # (E, E)
        "out_b": jnp.zeros((1, E), jnp.float32),
        "ln_mlp_g": jnp.ones((1, E), jnp.float32),
        "ln_mlp_b": jnp.zeros((1, E), jnp.float32),
        "mlp_norm_g": jnp.ones((1, E), jnp.float32),
        "mlp_norm_b": jnp.zeros((1, E), jnp.float32),
        "w1": lin1_w.T,                                # (E, M)
        "b1": jnp.zeros((1, M), jnp.float32),
        "w2": lin2_w.T,                                # (M, E)
        "b2": jnp.zeros((1, E), jnp.float32),
    }


if __name__ == "__main__":
    # batch, seq(num_patches+1), embed_dim, mlp_dim, heads — small demo shapes.
    B, S, E, M, H = 2, 8, 32, 64, 4

    key = jax.random.PRNGKey(0)
    kx, kp = jax.random.split(key)
    x = jax.random.normal(kx, (B, S, E), jnp.float32)
    params = init_params(kp, E, M)                        # canonical f32 params
    kparams = prepare_kernel_params(params, num_heads=H)  # bf16 / scale-folded

    out = transformer_block(x, kparams, num_heads=H)
    out = jax.block_until_ready(out)

    ref = reference_block(x, params, num_heads=H)
    # bf16 matmul inputs + approx reciprocal -> loosen tolerance vs f32 reference.
    np.testing.assert_allclose(np.asarray(out), np.asarray(ref), rtol=2e-2, atol=2e-2)

    print("KERNEL_OK")
</pallas_src>

<mosaic_0001>
module attributes {stable_mosaic.version = 11 : i64} {
  func.func @transformer_block_kernel(%arg0: i32, %arg1: memref<1x8x32xf32, #tpu.memory_space<vmem>>, %arg2: memref<1x32xf32, #tpu.memory_space<vmem>>, %arg3: memref<1x32xf32, #tpu.memory_space<vmem>>, %arg4: memref<32x96xbf16, #tpu.memory_space<vmem>>, %arg5: memref<1x96xf32, #tpu.memory_space<vmem>>, %arg6: memref<32x32xbf16, #tpu.memory_space<vmem>>, %arg7: memref<1x32xf32, #tpu.memory_space<vmem>>, %arg8: memref<1x32xf32, #tpu.memory_space<vmem>>, %arg9: memref<1x32xf32, #tpu.memory_space<vmem>>, %arg10: memref<1x32xf32, #tpu.memory_space<vmem>>, %arg11: memref<1x32xf32, #tpu.memory_space<vmem>>, %arg12: memref<32x64xbf16, #tpu.memory_space<vmem>>, %arg13: memref<1x64xf32, #tpu.memory_space<vmem>>, %arg14: memref<64x32xbf16, #tpu.memory_space<vmem>>, %arg15: memref<1x32xf32, #tpu.memory_space<vmem>>, %arg16: memref<1x8x32xf32, #tpu.memory_space<vmem>>, %arg17: memref<1x8x96xbf16, #tpu.memory_space<vmem>>, %arg18: memref<1x8x32xbf16, #tpu.memory_space<vmem>>) attributes {dimension_semantics = [#tpu.dimension_semantics<parallel>], iteration_bounds = array<i64: 2>, scalar_prefetch = 0 : i64, scratch_operands = 2 : i64, tpu.core_type = #tpu.core_type<tc>, window_params = [{transform_indices = @transform_0, window_bounds = array<i64: 1, 8, 32>}, {pipeline_mode = #tpu.pipeline_mode<synchronous>, transform_indices = @transform_1, window_bounds = array<i64: 1, 32>}, {pipeline_mode = #tpu.pipeline_mode<synchronous>, transform_indices = @transform_2, window_bounds = array<i64: 1, 32>}, {pipeline_mode = #tpu.pipeline_mode<synchronous>, transform_indices = @transform_3, window_bounds = array<i64: 32, 96>}, {pipeline_mode = #tpu.pipeline_mode<synchronous>, transform_indices = @transform_4, window_bounds = array<i64: 1, 96>}, {pipeline_mode = #tpu.pipeline_mode<synchronous>, transform_indices = @transform_5, window_bounds = array<i64: 32, 32>}, {pipeline_mode = #tpu.pipeline_mode<synchronous>, transform_indices = @transform_6, window_bounds = array<i64: 1, 32>}, {pipeline_mode = #tpu.pipeline_mode<synchronous>, transform_indices = @transform_7, window_bounds = array<i64: 1, 32>}, {pipeline_mode = #tpu.pipeline_mode<synchronous>, transform_indices = @transform_8, window_bounds = array<i64: 1, 32>}, {pipeline_mode = #tpu.pipeline_mode<synchronous>, transform_indices = @transform_9, window_bounds = array<i64: 1, 32>}, {pipeline_mode = #tpu.pipeline_mode<synchronous>, transform_indices = @transform_10, window_bounds = array<i64: 1, 32>}, {pipeline_mode = #tpu.pipeline_mode<synchronous>, transform_indices = @transform_11, window_bounds = array<i64: 32, 64>}, {pipeline_mode = #tpu.pipeline_mode<synchronous>, transform_indices = @transform_12, window_bounds = array<i64: 1, 64>}, {pipeline_mode = #tpu.pipeline_mode<synchronous>, transform_indices = @transform_13, window_bounds = array<i64: 64, 32>}, {pipeline_mode = #tpu.pipeline_mode<synchronous>, transform_indices = @transform_14, window_bounds = array<i64: 1, 32>}, {transform_indices = @transform_15, window_bounds = array<i64: 1, 8, 32>}]} {
    %c0 = arith.constant 0 : index
    %c0_0 = arith.constant 0 : index
    %0 = vector.load %arg2[%c0, %c0_0] : memref<1x32xf32, #tpu.memory_space<vmem>>, vector<1x32xf32>
    %c0_1 = arith.constant 0 : index
    %c0_2 = arith.constant 0 : index
    %1 = vector.load %arg3[%c0_1, %c0_2] : memref<1x32xf32, #tpu.memory_space<vmem>>, vector<1x32xf32>
    %c0_3 = arith.constant 0 : index
    %c0_4 = arith.constant 0 : index
    %2 = vector.load %arg8[%c0_3, %c0_4] : memref<1x32xf32, #tpu.memory_space<vmem>>, vector<1x32xf32>
    %c0_5 = arith.constant 0 : index
    %c0_6 = arith.constant 0 : index
    %3 = vector.load %arg9[%c0_5, %c0_6] : memref<1x32xf32, #tpu.memory_space<vmem>>, vector<1x32xf32>
    %c0_7 = arith.constant 0 : index
    %c0_8 = arith.constant 0 : index
    %4 = vector.load %arg10[%c0_7, %c0_8] : memref<1x32xf32, #tpu.memory_space<vmem>>, vector<1x32xf32>
    %c0_9 = arith.constant 0 : index
    %c0_10 = arith.constant 0 : index
    %5 = vector.load %arg11[%c0_9, %c0_10] : memref<1x32xf32, #tpu.memory_space<vmem>>, vector<1x32xf32>
    %c0_11 = arith.constant 0 : index
    %c0_12 = arith.constant 0 : index
    %6 = vector.load %arg5[%c0_11, %c0_12] : memref<1x96xf32, #tpu.memory_space<vmem>>, vector<1x96xf32>
    %c0_13 = arith.constant 0 : index
    %c0_14 = arith.constant 0 : index
    %7 = vector.load %arg7[%c0_13, %c0_14] : memref<1x32xf32, #tpu.memory_space<vmem>>, vector<1x32xf32>
    %c0_15 = arith.constant 0 : index
    %c0_16 = arith.constant 0 : index
    %8 = vector.load %arg13[%c0_15, %c0_16] : memref<1x64xf32, #tpu.memory_space<vmem>>, vector<1x64xf32>
    %c0_17 = arith.constant 0 : index
    %c0_18 = arith.constant 0 : index
    %9 = vector.load %arg15[%c0_17, %c0_18] : memref<1x32xf32, #tpu.memory_space<vmem>>, vector<1x32xf32>
    %c0_19 = arith.constant 0 : index
    %c0_20 = arith.constant 0 : index
    %c0_21 = arith.constant 0 : index
    %10 = vector.load %arg1[%c0_19, %c0_20, %c0_21] : memref<1x8x32xf32, #tpu.memory_space<vmem>>, vector<1x8x32xf32>
    %11 = vector.shape_cast %10 : vector<1x8x32xf32> to vector<8x32xf32>
    %cst = arith.constant dense<0.000000e+00> : vector<8xf32>
    %12 = vector.multi_reduction <add>, %11, %cst [1] : vector<8x32xf32> to vector<8xf32>
    %13 = vector.shape_cast %12 : vector<8xf32> to vector<8x1xf32>
    %cst_22 = arith.constant 3.200000e+01 : f32
    %14 = vector.broadcast %cst_22 : f32 to vector<8x1xf32>
    %15 = arith.divf %13, %14 : vector<8x1xf32>
    %16 = vector.broadcast %15 : vector<8x1xf32> to vector<8x32xf32>
    %17 = arith.subf %11, %16 : vector<8x32xf32>
    %18 = arith.mulf %17, %17 : vector<8x32xf32>
    %cst_23 = arith.constant dense<0.000000e+00> : vector<8xf32>
    %19 = vector.multi_reduction <add>, %18, %cst_23 [1] : vector<8x32xf32> to vector<8xf32>
    %20 = vector.shape_cast %19 : vector<8xf32> to vector<8x1xf32>
    %cst_24 = arith.constant 3.200000e+01 : f32
    %21 = vector.broadcast %cst_24 : f32 to vector<8x1xf32>
    %22 = arith.divf %20, %21 : vector<8x1xf32>
    %23 = vector.broadcast %15 : vector<8x1xf32> to vector<8x32xf32>
    %24 = arith.subf %11, %23 : vector<8x32xf32>
    %cst_25 = arith.constant 9.99999996E-13 : f32
    %25 = vector.broadcast %cst_25 : f32 to vector<8x1xf32>
    %26 = arith.addf %22, %25 : vector<8x1xf32>
    %27 = math.rsqrt %26 : vector<8x1xf32>
    %28 = vector.broadcast %27 : vector<8x1xf32> to vector<8x32xf32>
    %29 = arith.mulf %24, %28 : vector<8x32xf32>
    %30 = vector.broadcast %0 : vector<1x32xf32> to vector<8x32xf32>
    %31 = arith.mulf %29, %30 : vector<8x32xf32>
    %32 = vector.broadcast %1 : vector<1x32xf32> to vector<8x32xf32>
    %33 = arith.addf %31, %32 : vector<8x32xf32>
    %34 = arith.truncf %33 : vector<8x32xf32> to vector<8x32xbf16>
    %c0_26 = arith.constant 0 : index
    %c0_27 = arith.constant 0 : index
    %35 = vector.load %arg4[%c0_26, %c0_27] : memref<32x96xbf16, #tpu.memory_space<vmem>>, vector<32x96xbf16>
    %cst_28 = arith.constant dense<0.000000e+00> : vector<8x96xf32>
    %36 = tpu.matmul %34, %35, %cst_28 {dimension_numbers = #tpu.dot_dimension_numbers<[1], [0], [0], [1], [0, 0, 1, 1], [], []>} : vector<8x32xbf16>, vector<32x96xbf16>, vector<8x96xf32> -> vector<8x96xf32>
    %37 = vector.broadcast %6 : vector<1x96xf32> to vector<8x96xf32>
    %38 = arith.addf %36, %37 : vector<8x96xf32>
    %39 = vector.shape_cast %38 : vector<8x96xf32> to vector<1x8x96xf32>
    %40 = arith.truncf %39 : vector<1x8x96xf32> to vector<1x8x96xbf16>
    %c0_29 = arith.constant 0 : index
    %c0_30 = arith.constant 0 : index
    %c0_31 = arith.constant 0 : index
    %41 = vector.load %arg17[%c0_29, %c0_30, %c0_31] : memref<1x8x96xbf16, #tpu.memory_space<vmem>>, vector<1x8x96xbf16>
    tpu.vector_store %arg17[%c0_29, %c0_30, %c0_31], %40 {strides = array<i32>} : memref<1x8x96xbf16, #tpu.memory_space<vmem>>, vector<1x8x96xbf16>,
    %c0_i32 = arith.constant 0 : i32
    %c1_i32 = arith.constant 1 : i32
    %42 = arith.muli %c0_i32, %c1_i32 : i32
    %c0_i32_32 = arith.constant 0 : i32
    %43 = arith.addi %c0_i32_32, %42 : i32
    %44 = arith.index_cast %43 : i32 to index
    %c0_33 = arith.constant 0 : index
    %c0_34 = arith.constant 0 : index
    %45 = vector.load %arg17[%44, %c0_33, %c0_34] : memref<1x8x96xbf16, #tpu.memory_space<vmem>>, vector<1x8x8xbf16>
    %46 = vector.shape_cast %45 : vector<1x8x8xbf16> to vector<8x8xbf16>
    %47 = arith.index_cast %43 : i32 to index
    %c0_35 = arith.constant 0 : index
    %c32 = arith.constant 32 : index
    %48 = vector.load %arg17[%47, %c0_35, %c32] : memref<1x8x96xbf16, #tpu.memory_space<vmem>>, vector<1x8x8xbf16>
    %49 = vector.shape_cast %48 : vector<1x8x8xbf16> to vector<8x8xbf16>
    %50 = arith.index_cast %43 : i32 to index
    %c0_36 = arith.constant 0 : index
    %c64 = arith.constant 64 : index
    %51 = vector.load %arg17[%50, %c0_36, %c64] : memref<1x8x96xbf16, #tpu.memory_space<vmem>>, vector<1x8x8xbf16>
    %52 = vector.shape_cast %51 : vector<1x8x8xbf16> to vector<8x8xbf16>
    %cst_37 = arith.constant dense<0.000000e+00> : vector<8x8xf32>
    %53 = tpu.matmul %46, %49, %cst_37 {dimension_numbers = #tpu.dot_dimension_numbers<[1], [1], [0], [0], [0, 0, 1, 0], [], []>} : vector<8x8xbf16>, vector<8x8xbf16>, vector<8x8xf32> -> vector<8x8xf32>
    %cst_38 = arith.constant dense<0xFF800000> : vector<8xf32>
    %54 = vector.multi_reduction <maximumf>, %53, %cst_38 [1] : vector<8x8xf32> to vector<8xf32>
    %55 = vector.shape_cast %54 : vector<8xf32> to vector<8x1xf32>
    %56 = vector.broadcast %55 : vector<8x1xf32> to vector<8x8xf32>
    %57 = arith.subf %53, %56 : vector<8x8xf32>
    %58 = math.exp %57 : vector<8x8xf32>
    %cst_39 = arith.constant dense<0.000000e+00> : vector<8xf32>
    %59 = vector.multi_reduction <add>, %58, %cst_39 [1] : vector<8x8xf32> to vector<8xf32>
    %60 = vector.shape_cast %59 : vector<8xf32> to vector<8x1xf32>
    %61 = tpu.reciprocal %60 {approx = true} : vector<8x1xf32> -> vector<8x1xf32>
    %62 = vector.broadcast %61 : vector<8x1xf32> to vector<8x8xf32>
    %63 = arith.mulf %58, %62 : vector<8x8xf32>
    %64 = arith.truncf %63 : vector<8x8xf32> to vector<8x8xbf16>
    %cst_40 = arith.constant dense<0.000000e+00> : vector<8x8xf32>
    %65 = tpu.matmul %64, %52, %cst_40 {dimension_numbers = #tpu.dot_dimension_numbers<[1], [0], [0], [1], [0, 0, 1, 1], [], []>} : vector<8x8xbf16>, vector<8x8xbf16>, vector<8x8xf32> -> vector<8x8xf32>
    %66 = arith.truncf %65 : vector<8x8xf32> to vector<8x8xbf16>
    %67 = arith.index_cast %43 : i32 to index
    %c0_41 = arith.constant 0 : index
    %c0_42 = arith.constant 0 : index
    %68 = vector.load %arg18[%67, %c0_41, %c0_42] : memref<1x8x32xbf16, #tpu.memory_space<vmem>>, vector<1x8x8xbf16>
    %69 = vector.shape_cast %68 : vector<1x8x8xbf16> to vector<8x8xbf16>
    %70 = vector.shape_cast %66 : vector<8x8xbf16> to vector<1x8x8xbf16>
    tpu.vector_store %arg18[%67, %c0_41, %c0_42], %70 {strides = array<i32>} : memref<1x8x32xbf16, #tpu.memory_space<vmem>>, vector<1x8x8xbf16>,
    %71 = arith.index_cast %43 : i32 to index
    %c0_43 = arith.constant 0 : index
    %c8 = arith.constant 8 : index
    %72 = vector.load %arg17[%71, %c0_43, %c8] : memref<1x8x96xbf16, #tpu.memory_space<vmem>>, vector<1x8x8xbf16>
    %73 = vector.shape_cast %72 : vector<1x8x8xbf16> to vector<8x8xbf16>
    %74 = arith.index_cast %43 : i32 to index
    %c0_44 = arith.constant 0 : index
    %c40 = arith.constant 40 : index
    %75 = vector.load %arg17[%74, %c0_44, %c40] : memref<1x8x96xbf16, #tpu.memory_space<vmem>>, vector<1x8x8xbf16>
    %76 = vector.shape_cast %75 : vector<1x8x8xbf16> to vector<8x8xbf16>
    %77 = arith.index_cast %43 : i32 to index
    %c0_45 = arith.constant 0 : index
    %c72 = arith.constant 72 : index
    %78 = vector.load %arg17[%77, %c0_45, %c72] : memref<1x8x96xbf16, #tpu.memory_space<vmem>>, vector<1x8x8xbf16>
    %79 = vector.shape_cast %78 : vector<1x8x8xbf16> to vector<8x8xbf16>
    %cst_46 = arith.constant dense<0.000000e+00> : vector<8x8xf32>
    %80 = tpu.matmul %73, %76, %cst_46 {dimension_numbers = #tpu.dot_dimension_numbers<[1], [1], [0], [0], [0, 0, 1, 0], [], []>} : vector<8x8xbf16>, vector<8x8xbf16>, vector<8x8xf32> -> vector<8x8xf32>
    %cst_47 = arith.constant dense<0xFF800000> : vector<8xf32>
    %81 = vector.multi_reduction <maximumf>, %80, %cst_47 [1] : vector<8x8xf32> to vector<8xf32>
    %82 = vector.shape_cast %81 : vector<8xf32> to vector<8x1xf32>
    %83 = vector.broadcast %82 : vector<8x1xf32> to vector<8x8xf32>
    %84 = arith.subf %80, %83 : vector<8x8xf32>
    %85 = math.exp %84 : vector<8x8xf32>
    %cst_48 = arith.constant dense<0.000000e+00> : vector<8xf32>
    %86 = vector.multi_reduction <add>, %85, %cst_48 [1] : vector<8x8xf32> to vector<8xf32>
    %87 = vector.shape_cast %86 : vector<8xf32> to vector<8x1xf32>
    %88 = tpu.reciprocal %87 {approx = true} : vector<8x1xf32> -> vector<8x1xf32>
    %89 = vector.broadcast %88 : vector<8x1xf32> to vector<8x8xf32>
    %90 = arith.mulf %85, %89 : vector<8x8xf32>
    %91 = arith.truncf %90 : vector<8x8xf32> to vector<8x8xbf16>
    %cst_49 = arith.constant dense<0.000000e+00> : vector<8x8xf32>
    %92 = tpu.matmul %91, %79, %cst_49 {dimension_numbers = #tpu.dot_dimension_numbers<[1], [0], [0], [1], [0, 0, 1, 1], [], []>} : vector<8x8xbf16>, vector<8x8xbf16>, vector<8x8xf32> -> vector<8x8xf32>
    %93 = arith.truncf %92 : vector<8x8xf32> to vector<8x8xbf16>
    %94 = arith.index_cast %43 : i32 to index
    %c0_50 = arith.constant 0 : index
    %c8_51 = arith.constant 8 : index
    %95 = vector.load %arg18[%94, %c0_50, %c8_51] : memref<1x8x32xbf16, #tpu.memory_space<vmem>>, vector<1x8x8xbf16>
    %96 = vector.shape_cast %95 : vector<1x8x8xbf16> to vector<8x8xbf16>
    %97 = vector.shape_cast %93 : vector<8x8xbf16> to vector<1x8x8xbf16>
    tpu.vector_store %arg18[%94, %c0_50, %c8_51], %97 {strides = array<i32>} : memref<1x8x32xbf16, #tpu.memory_space<vmem>>, vector<1x8x8xbf16>,
    %98 = arith.index_cast %43 : i32 to index
    %c0_52 = arith.constant 0 : index
    %c16 = arith.constant 16 : index
    %99 = vector.load %arg17[%98, %c0_52, %c16] : memref<1x8x96xbf16, #tpu.memory_space<vmem>>, vector<1x8x8xbf16>
    %100 = vector.shape_cast %99 : vector<1x8x8xbf16> to vector<8x8xbf16>
    %101 = arith.index_cast %43 : i32 to index
    %c0_53 = arith.constant 0 : index
    %c48 = arith.constant 48 : index
    %102 = vector.load %arg17[%101, %c0_53, %c48] : memref<1x8x96xbf16, #tpu.memory_space<vmem>>, vector<1x8x8xbf16>
    %103 = vector.shape_cast %102 : vector<1x8x8xbf16> to vector<8x8xbf16>
    %104 = arith.index_cast %43 : i32 to index
    %c0_54 = arith.constant 0 : index
    %c80 = arith.constant 80 : index
    %105 = vector.load %arg17[%104, %c0_54, %c80] : memref<1x8x96xbf16, #tpu.memory_space<vmem>>, vector<1x8x8xbf16>
    %106 = vector.shape_cast %105 : vector<1x8x8xbf16> to vector<8x8xbf16>
    %cst_55 = arith.constant dense<0.000000e+00> : vector<8x8xf32>
    %107 = tpu.matmul %100, %103, %cst_55 {dimension_numbers = #tpu.dot_dimension_numbers<[1], [1], [0], [0], [0, 0, 1, 0], [], []>} : vector<8x8xbf16>, vector<8x8xbf16>, vector<8x8xf32> -> vector<8x8xf32>
    %cst_56 = arith.constant dense<0xFF800000> : vector<8xf32>
    %108 = vector.multi_reduction <maximumf>, %107, %cst_56 [1] : vector<8x8xf32> to vector<8xf32>
    %109 = vector.shape_cast %108 : vector<8xf32> to vector<8x1xf32>
    %110 = vector.broadcast %109 : vector<8x1xf32> to vector<8x8xf32>
    %111 = arith.subf %107, %110 : vector<8x8xf32>
    %112 = math.exp %111 : vector<8x8xf32>
    %cst_57 = arith.constant dense<0.000000e+00> : vector<8xf32>
    %113 = vector.multi_reduction <add>, %112, %cst_57 [1] : vector<8x8xf32> to vector<8xf32>
    %114 = vector.shape_cast %113 : vector<8xf32> to vector<8x1xf32>
    %115 = tpu.reciprocal %114 {approx = true} : vector<8x1xf32> -> vector<8x1xf32>
    %116 = vector.broadcast %115 : vector<8x1xf32> to vector<8x8xf32>
    %117 = arith.mulf %112, %116 : vector<8x8xf32>
    %118 = arith.truncf %117 : vector<8x8xf32> to vector<8x8xbf16>
    %cst_58 = arith.constant dense<0.000000e+00> : vector<8x8xf32>
    %119 = tpu.matmul %118, %106, %cst_58 {dimension_numbers = #tpu.dot_dimension_numbers<[1], [0], [0], [1], [0, 0, 1, 1], [], []>} : vector<8x8xbf16>, vector<8x8xbf16>, vector<8x8xf32> -> vector<8x8xf32>
    %120 = arith.truncf %119 : vector<8x8xf32> to vector<8x8xbf16>
    %121 = arith.index_cast %43 : i32 to index
    %c0_59 = arith.constant 0 : index
    %c16_60 = arith.constant 16 : index
    %122 = vector.load %arg18[%121, %c0_59, %c16_60] : memref<1x8x32xbf16, #tpu.memory_space<vmem>>, vector<1x8x8xbf16>
    %123 = vector.shape_cast %122 : vector<1x8x8xbf16> to vector<8x8xbf16>
    %124 = vector.shape_cast %120 : vector<8x8xbf16> to vector<1x8x8xbf16>
    tpu.vector_store %arg18[%121, %c0_59, %c16_60], %124 {strides = array<i32>} : memref<1x8x32xbf16, #tpu.memory_space<vmem>>, vector<1x8x8xbf16>,
    %125 = arith.index_cast %43 : i32 to index
    %c0_61 = arith.constant 0 : index
    %c24 = arith.constant 24 : index
    %126 = vector.load %arg17[%125, %c0_61, %c24] : memref<1x8x96xbf16, #tpu.memory_space<vmem>>, vector<1x8x8xbf16>
    %127 = vector.shape_cast %126 : vector<1x8x8xbf16> to vector<8x8xbf16>
    %128 = arith.index_cast %43 : i32 to index
    %c0_62 = arith.constant 0 : index
    %c56 = arith.constant 56 : index
    %129 = vector.load %arg17[%128, %c0_62, %c56] : memref<1x8x96xbf16, #tpu.memory_space<vmem>>, vector<1x8x8xbf16>
    %130 = vector.shape_cast %129 : vector<1x8x8xbf16> to vector<8x8xbf16>
    %131 = arith.index_cast %43 : i32 to index
    %c0_63 = arith.constant 0 : index
    %c88 = arith.constant 88 : index
    %132 = vector.load %arg17[%131, %c0_63, %c88] : memref<1x8x96xbf16, #tpu.memory_space<vmem>>, vector<1x8x8xbf16>
    %133 = vector.shape_cast %132 : vector<1x8x8xbf16> to vector<8x8xbf16>
    %cst_64 = arith.constant dense<0.000000e+00> : vector<8x8xf32>
    %134 = tpu.matmul %127, %130, %cst_64 {dimension_numbers = #tpu.dot_dimension_numbers<[1], [1], [0], [0], [0, 0, 1, 0], [], []>} : vector<8x8xbf16>, vector<8x8xbf16>, vector<8x8xf32> -> vector<8x8xf32>
    %cst_65 = arith.constant dense<0xFF800000> : vector<8xf32>
    %135 = vector.multi_reduction <maximumf>, %134, %cst_65 [1] : vector<8x8xf32> to vector<8xf32>
    %136 = vector.shape_cast %135 : vector<8xf32> to vector<8x1xf32>
    %137 = vector.broadcast %136 : vector<8x1xf32> to vector<8x8xf32>
    %138 = arith.subf %134, %137 : vector<8x8xf32>
    %139 = math.exp %138 : vector<8x8xf32>
    %cst_66 = arith.constant dense<0.000000e+00> : vector<8xf32>
    %140 = vector.multi_reduction <add>, %139, %cst_66 [1] : vector<8x8xf32> to vector<8xf32>
    %141 = vector.shape_cast %140 : vector<8xf32> to vector<8x1xf32>
    %142 = tpu.reciprocal %141 {approx = true} : vector<8x1xf32> -> vector<8x1xf32>
    %143 = vector.broadcast %142 : vector<8x1xf32> to vector<8x8xf32>
    %144 = arith.mulf %139, %143 : vector<8x8xf32>
    %145 = arith.truncf %144 : vector<8x8xf32> to vector<8x8xbf16>
    %cst_67 = arith.constant dense<0.000000e+00> : vector<8x8xf32>
    %146 = tpu.matmul %145, %133, %cst_67 {dimension_numbers = #tpu.dot_dimension_numbers<[1], [0], [0], [1], [0, 0, 1, 1], [], []>} : vector<8x8xbf16>, vector<8x8xbf16>, vector<8x8xf32> -> vector<8x8xf32>
    %147 = arith.truncf %146 : vector<8x8xf32> to vector<8x8xbf16>
    %148 = arith.index_cast %43 : i32 to index
    %c0_68 = arith.constant 0 : index
    %c24_69 = arith.constant 24 : index
    %149 = vector.load %arg18[%148, %c0_68, %c24_69] : memref<1x8x32xbf16, #tpu.memory_space<vmem>>, vector<1x8x8xbf16>
    %150 = vector.shape_cast %149 : vector<1x8x8xbf16> to vector<8x8xbf16>
    %151 = vector.shape_cast %147 : vector<8x8xbf16> to vector<1x8x8xbf16>
    tpu.vector_store %arg18[%148, %c0_68, %c24_69], %151 {strides = array<i32>} : memref<1x8x32xbf16, #tpu.memory_space<vmem>>, vector<1x8x8xbf16>,
    %c1_i32_70 = arith.constant 1 : i32
    %c0_71 = arith.constant 0 : index
    %c0_72 = arith.constant 0 : index
    %c0_73 = arith.constant 0 : index
    %152 = vector.load %arg18[%c0_71, %c0_72, %c0_73] : memref<1x8x32xbf16, #tpu.memory_space<vmem>>, vector<1x8x32xbf16>
    %153 = vector.shape_cast %152 : vector<1x8x32xbf16> to vector<8x32xbf16>
    %c0_74 = arith.constant 0 : index
    %c0_75 = arith.constant 0 : index
    %154 = vector.load %arg6[%c0_74, %c0_75] : memref<32x32xbf16, #tpu.memory_space<vmem>>, vector<32x32xbf16>
    %cst_76 = arith.constant dense<0.000000e+00> : vector<8x32xf32>
    %155 = tpu.matmul %153, %154, %cst_76 {dimension_numbers = #tpu.dot_dimension_numbers<[1], [0], [0], [1], [0, 0, 1, 1], [], []>} : vector<8x32xbf16>, vector<32x32xbf16>, vector<8x32xf32> -> vector<8x32xf32>
    %156 = vector.broadcast %7 : vector<1x32xf32> to vector<8x32xf32>
    %157 = arith.addf %155, %156 : vector<8x32xf32>
    %158 = arith.addf %157, %11 : vector<8x32xf32>
    %cst_77 = arith.constant dense<0.000000e+00> : vector<8xf32>
    %159 = vector.multi_reduction <add>, %158, %cst_77 [1] : vector<8x32xf32> to vector<8xf32>
    %160 = vector.shape_cast %159 : vector<8xf32> to vector<8x1xf32>
    %cst_78 = arith.constant 3.200000e+01 : f32
    %161 = vector.broadcast %cst_78 : f32 to vector<8x1xf32>
    %162 = arith.divf %160, %161 : vector<8x1xf32>
    %163 = vector.broadcast %162 : vector<8x1xf32> to vector<8x32xf32>
    %164 = arith.subf %158, %163 : vector<8x32xf32>
    %165 = arith.mulf %164, %164 : vector<8x32xf32>
    %cst_79 = arith.constant dense<0.000000e+00> : vector<8xf32>
    %166 = vector.multi_reduction <add>, %165, %cst_79 [1] : vector<8x32xf32> to vector<8xf32>
    %167 = vector.shape_cast %166 : vector<8xf32> to vector<8x1xf32>
    %cst_80 = arith.constant 3.200000e+01 : f32
    %168 = vector.broadcast %cst_80 : f32 to vector<8x1xf32>
    %169 = arith.divf %167, %168 : vector<8x1xf32>
    %170 = vector.broadcast %162 : vector<8x1xf32> to vector<8x32xf32>
    %171 = arith.subf %158, %170 : vector<8x32xf32>
    %cst_81 = arith.constant 9.99999996E-13 : f32
    %172 = vector.broadcast %cst_81 : f32 to vector<8x1xf32>
    %173 = arith.addf %169, %172 : vector<8x1xf32>
    %174 = math.rsqrt %173 : vector<8x1xf32>
    %175 = vector.broadcast %174 : vector<8x1xf32> to vector<8x32xf32>
    %176 = arith.mulf %171, %175 : vector<8x32xf32>
    %177 = vector.broadcast %2 : vector<1x32xf32> to vector<8x32xf32>
    %178 = arith.mulf %176, %177 : vector<8x32xf32>
    %179 = vector.broadcast %3 : vector<1x32xf32> to vector<8x32xf32>
    %180 = arith.addf %178, %179 : vector<8x32xf32>
    %cst_82 = arith.constant dense<0.000000e+00> : vector<8xf32>
    %181 = vector.multi_reduction <add>, %180, %cst_82 [1] : vector<8x32xf32> to vector<8xf32>
    %182 = vector.shape_cast %181 : vector<8xf32> to vector<8x1xf32>
    %cst_83 = arith.constant 3.200000e+01 : f32
    %183 = vector.broadcast %cst_83 : f32 to vector<8x1xf32>
    %184 = arith.divf %182, %183 : vector<8x1xf32>
    %185 = vector.broadcast %184 : vector<8x1xf32> to vector<8x32xf32>
    %186 = arith.subf %180, %185 : vector<8x32xf32>
    %187 = arith.mulf %186, %186 : vector<8x32xf32>
    %cst_84 = arith.constant dense<0.000000e+00> : vector<8xf32>
    %188 = vector.multi_reduction <add>, %187, %cst_84 [1] : vector<8x32xf32> to vector<8xf32>
    %189 = vector.shape_cast %188 : vector<8xf32> to vector<8x1xf32>
    %cst_85 = arith.constant 3.200000e+01 : f32
    %190 = vector.broadcast %cst_85 : f32 to vector<8x1xf32>
    %191 = arith.divf %189, %190 : vector<8x1xf32>
    %192 = vector.broadcast %184 : vector<8x1xf32> to vector<8x32xf32>
    %193 = arith.subf %180, %192 : vector<8x32xf32>
    %cst_86 = arith.constant 9.99999996E-13 : f32
    %194 = vector.broadcast %cst_86 : f32 to vector<8x1xf32>
    %195 = arith.addf %191, %194 : vector<8x1xf32>
    %196 = math.rsqrt %195 : vector<8x1xf32>
    %197 = vector.broadcast %196 : vector<8x1xf32> to vector<8x32xf32>
    %198 = arith.mulf %193, %197 : vector<8x32xf32>
    %199 = vector.broadcast %4 : vector<1x32xf32> to vector<8x32xf32>
    %200 = arith.mulf %198, %199 : vector<8x32xf32>
    %201 = vector.broadcast %5 : vector<1x32xf32> to vector<8x32xf32>
    %202 = arith.addf %200, %201 : vector<8x32xf32>
    %203 = arith.truncf %202 : vector<8x32xf32> to vector<8x32xbf16>
    %c0_87 = arith.constant 0 : index
    %c0_88 = arith.constant 0 : index
    %204 = vector.load %arg12[%c0_87, %c0_88] : memref<32x64xbf16, #tpu.memory_space<vmem>>, vector<32x64xbf16>
    %cst_89 = arith.constant dense<0.000000e+00> : vector<8x64xf32>
    %205 = tpu.matmul %203, %204, %cst_89 {dimension_numbers = #tpu.dot_dimension_numbers<[1], [0], [0], [1], [0, 0, 1, 1], [], []>} : vector<8x32xbf16>, vector<32x64xbf16>, vector<8x64xf32> -> vector<8x64xf32>
    %206 = vector.broadcast %8 : vector<1x64xf32> to vector<8x64xf32>
    %207 = arith.addf %205, %206 : vector<8x64xf32>
    %cst_90 = arith.constant 5.000000e-01 : f32
    %208 = vector.broadcast %cst_90 : f32 to vector<8x64xf32>
    %209 = arith.mulf %208, %207 : vector<8x64xf32>
    %cst_91 = arith.constant 0.707106769 : f32
    %210 = vector.broadcast %cst_91 : f32 to vector<8x64xf32>
    %211 = arith.mulf %207, %210 : vector<8x64xf32>
    %212 = math.erf %211 : vector<8x64xf32>
    %cst_92 = arith.constant 1.000000e+00 : f32
    %213 = vector.broadcast %cst_92 : f32 to vector<8x64xf32>
    %214 = arith.addf %213, %212 : vector<8x64xf32>
    %215 = arith.mulf %209, %214 : vector<8x64xf32>
    %216 = arith.truncf %215 : vector<8x64xf32> to vector<8x64xbf16>
    %c0_93 = arith.constant 0 : index
    %c0_94 = arith.constant 0 : index
    %217 = vector.load %arg14[%c0_93, %c0_94] : memref<64x32xbf16, #tpu.memory_space<vmem>>, vector<64x32xbf16>
    %cst_95 = arith.constant dense<0.000000e+00> : vector<8x32xf32>
    %218 = tpu.matmul %216, %217, %cst_95 {dimension_numbers = #tpu.dot_dimension_numbers<[1], [0], [0], [1], [0, 0, 1, 1], [], []>} : vector<8x64xbf16>, vector<64x32xbf16>, vector<8x32xf32> -> vector<8x32xf32>
    %219 = vector.broadcast %9 : vector<1x32xf32> to vector<8x32xf32>
    %220 = arith.addf %218, %219 : vector<8x32xf32>
    %221 = arith.addf %220, %158 : vector<8x32xf32>
    %222 = vector.shape_cast %221 : vector<8x32xf32> to vector<1x8x32xf32>
    %c0_96 = arith.constant 0 : index
    %c0_97 = arith.constant 0 : index
    %c0_98 = arith.constant 0 : index
    %223 = vector.load %arg16[%c0_96, %c0_97, %c0_98] : memref<1x8x32xf32, #tpu.memory_space<vmem>>, vector<1x8x32xf32>
    tpu.vector_store %arg16[%c0_96, %c0_97, %c0_98], %222 {strides = array<i32>} : memref<1x8x32xf32, #tpu.memory_space<vmem>>, vector<1x8x32xf32>,
    return
  }
  func.func @transform_0(%arg0: i32) -> (i32, i32, i32) {
    %c0_i32 = arith.constant 0 : i32
    %c0_i32_0 = arith.constant 0 : i32
    %c0_i32_1 = arith.constant 0 : i32
    return %arg0, %c0_i32, %c0_i32_0 : i32, i32, i32
  }
  func.func @transform_1(%arg0: i32) -> (i32, i32) {
    %c0_i32 = arith.constant 0 : i32
    %c0_i32_0 = arith.constant 0 : i32
    %c0_i32_1 = arith.constant 0 : i32
    return %c0_i32, %c0_i32_0 : i32, i32
  }
  func.func @transform_2(%arg0: i32) -> (i32, i32) {
    %c0_i32 = arith.constant 0 : i32
    %c0_i32_0 = arith.constant 0 : i32
    %c0_i32_1 = arith.constant 0 : i32
    return %c0_i32, %c0_i32_0 : i32, i32
  }
  func.func @transform_3(%arg0: i32) -> (i32, i32) {
    %c0_i32 = arith.constant 0 : i32
    %c0_i32_0 = arith.constant 0 : i32
    %c0_i32_1 = arith.constant 0 : i32
    return %c0_i32, %c0_i32_0 : i32, i32
  }
  func.func @transform_4(%arg0: i32) -> (i32, i32) {
    %c0_i32 = arith.constant 0 : i32
    %c0_i32_0 = arith.constant 0 : i32
    %c0_i32_1 = arith.constant 0 : i32
    return %c0_i32, %c0_i32_0 : i32, i32
  }
  func.func @transform_5(%arg0: i32) -> (i32, i32) {
    %c0_i32 = arith.constant 0 : i32
    %c0_i32_0 = arith.constant 0 : i32
    %c0_i32_1 = arith.constant 0 : i32
    return %c0_i32, %c0_i32_0 : i32, i32
  }
  func.func @transform_6(%arg0: i32) -> (i32, i32) {
    %c0_i32 = arith.constant 0 : i32
    %c0_i32_0 = arith.constant 0 : i32
    %c0_i32_1 = arith.constant 0 : i32
    return %c0_i32, %c0_i32_0 : i32, i32
  }
  func.func @transform_7(%arg0: i32) -> (i32, i32) {
    %c0_i32 = arith.constant 0 : i32
    %c0_i32_0 = arith.constant 0 : i32
    %c0_i32_1 = arith.constant 0 : i32
    return %c0_i32, %c0_i32_0 : i32, i32
  }
  func.func @transform_8(%arg0: i32) -> (i32, i32) {
    %c0_i32 = arith.constant 0 : i32
    %c0_i32_0 = arith.constant 0 : i32
    %c0_i32_1 = arith.constant 0 : i32
    return %c0_i32, %c0_i32_0 : i32, i32
  }
  func.func @transform_9(%arg0: i32) -> (i32, i32) {
    %c0_i32 = arith.constant 0 : i32
    %c0_i32_0 = arith.constant 0 : i32
    %c0_i32_1 = arith.constant 0 : i32
    return %c0_i32, %c0_i32_0 : i32, i32
  }
  func.func @transform_10(%arg0: i32) -> (i32, i32) {
    %c0_i32 = arith.constant 0 : i32
    %c0_i32_0 = arith.constant 0 : i32
    %c0_i32_1 = arith.constant 0 : i32
    return %c0_i32, %c0_i32_0 : i32, i32
  }
  func.func @transform_11(%arg0: i32) -> (i32, i32) {
    %c0_i32 = arith.constant 0 : i32
    %c0_i32_0 = arith.constant 0 : i32
    %c0_i32_1 = arith.constant 0 : i32
    return %c0_i32, %c0_i32_0 : i32, i32
  }
  func.func @transform_12(%arg0: i32) -> (i32, i32) {
    %c0_i32 = arith.constant 0 : i32
    %c0_i32_0 = arith.constant 0 : i32
    %c0_i32_1 = arith.constant 0 : i32
    return %c0_i32, %c0_i32_0 : i32, i32
  }
  func.func @transform_13(%arg0: i32) -> (i32, i32) {
    %c0_i32 = arith.constant 0 : i32
    %c0_i32_0 = arith.constant 0 : i32
    %c0_i32_1 = arith.constant 0 : i32
    return %c0_i32, %c0_i32_0 : i32, i32
  }
  func.func @transform_14(%arg0: i32) -> (i32, i32) {
    %c0_i32 = arith.constant 0 : i32
    %c0_i32_0 = arith.constant 0 : i32
    %c0_i32_1 = arith.constant 0 : i32
    return %c0_i32, %c0_i32_0 : i32, i32
  }
  func.func @transform_15(%arg0: i32) -> (i32, i32, i32) {
    %c0_i32 = arith.constant 0 : i32
    %c0_i32_0 = arith.constant 0 : i32
    %c0_i32_1 = arith.constant 0 : i32
    return %arg0, %c0_i32, %c0_i32_0 : i32, i32, i32
  }
}

</mosaic_0001>

<llo_original>
// kernel: tpu_custom_call.1
$region0: #{tpu_custom_call.1}
  #allocation0 [shape = 'u32[]', space=smem, size = 0x4, offset = 0x4, fixed_abs, tag = 'smem constant byte address 0x4 - core index']
  #allocation1 [shape = 'u32[144,128]{1,0:T(1,128)}', space=vmem, size = 0x12000, scoped, tag = 'internal scratch']
  #allocation2 [shape = 'bf16[1,8,96]{2,1,0:T(8,128)(2,1)}', space=vmem, size = 0x800, scoped, tag = 'scratch operand']
  #allocation3 [shape = 'bf16[1,8,32]{2,1,0:T(8,128)(2,1)}', space=vmem, size = 0x800, scoped, tag = 'scratch operand']
  %s0 = inlined_call_operand.vmem [shape: f32[2,8,32], index: 0, kind: input, shape index: {}]
  %s1 = inlined_call_operand.vmem [shape: f32[1,32], index: 1, kind: input, shape index: {}]
  %s2 = inlined_call_operand.vmem [shape: f32[1,32], index: 2, kind: input, shape index: {}]
  %s3 = inlined_call_operand.vmem [shape: bf16[32,96], index: 3, kind: input, shape index: {}]
  %s4 = inlined_call_operand.hbm [shape: f32[1,96], index: 4, kind: input, shape index: {}]
  %s5 = inlined_call_operand.vmem [shape: bf16[32,32], index: 5, kind: input, shape index: {}]
  %s6 = inlined_call_operand.hbm [shape: f32[1,32], index: 6, kind: input, shape index: {}]
  %s7 = inlined_call_operand.hbm [shape: f32[1,32], index: 7, kind: input, shape index: {}]
  %s8 = inlined_call_operand.hbm [shape: f32[1,32], index: 8, kind: input, shape index: {}]
  %s9 = inlined_call_operand.hbm [shape: f32[1,32], index: 9, kind: input, shape index: {}]
  %s10 = inlined_call_operand.vmem [shape: f32[1,32], index: 10, kind: input, shape index: {}]
  %s11 = inlined_call_operand.vmem [shape: bf16[32,64], index: 11, kind: input, shape index: {}]
  %s12 = inlined_call_operand.vmem [shape: f32[1,64], index: 12, kind: input, shape index: {}]
  %s13 = inlined_call_operand.vmem [shape: bf16[64,32], index: 13, kind: input, shape index: {}]
  %s14 = inlined_call_operand.vmem [shape: f32[1,32], index: 14, kind: input, shape index: {}]
  %s15 = inlined_call_operand.hbm [shape: f32[2,8,32], index: 15, kind: output, shape index: {}]
  %s16 = sld [smem:[#allocation0]]
  $region113: #{tpu_custom_call.1} parent=0
    _
  %s18 = ssub.s32 1, %s16
  %s19 = scalar_select 0, %s18, %s16
  $region1: #{tpu_custom_call.1} parent=0
    #allocation4 [shape = 'u8[512]{0}', space=vmem, size = 0x400, scoped, tag = 'input window, operand 4, single buffered']
    #allocation5 [shape = 's32[2]{0}', space=sflag, size = 0x8, scoped, tag = 'scoped memory for tpu_custom_call.1']
    #allocation6 [shape = 's32[2]{0}', space=sflag, size = 0x8, scoped, tag = 'scoped memory for tpu_custom_call.1']
    #allocation7 [shape = 'u8[512]{0}', space=vmem, size = 0x400, scoped, tag = 'input window, operand 6, single buffered']
    #allocation8 [shape = 's32[1]{0}', space=sflag, size = 0x4, scoped, tag = 'scoped memory for tpu_custom_call.1']
    #allocation9 [shape = 'u8[512]{0}', space=vmem, size = 0x400, scoped, tag = 'input window, operand 7, single buffered']
    #allocation10 [shape = 'u8[512]{0}', space=vmem, size = 0x400, scoped, tag = 'input window, operand 8, single buffered']
    #allocation11 [shape = 's32[1]{0}', space=sflag, size = 0x4, scoped, tag = 'scoped memory for tpu_custom_call.1']
    #allocation12 [shape = 'u8[512]{0}', space=vmem, size = 0x400, scoped, tag = 'input window, operand 9, single buffered']
    #allocation13 [shape = 'u8[8192]{0}', space=vmem, size = 0x2000, scoped, tag = 'output window, operand 0']
    %20 = vsyncpa [#allocation5], 0
    %21 = vsyncpa [#allocation8], 0
    %22 = vsyncpa [#allocation11], 0
    %23 = vsyncpa [#allocation6], 0
    %s24 = scalar_lea.sflag [#allocation6], 1
    %25 = vsyncpa %s24, 0
    loop: start=0, step=1, limit=4
    $region2: #{tpu_custom_call.1} parent=1 // loop_pre_header
      _
    $region3: #{tpu_custom_call.1} parent=1 // loop_header
      %s27 = sphi 0, %s31
      %p28 = scmp.ge.s32.totalorder %s27, 4
      %s37 = sphi 0, %s39
      %s40 = sphi 0, %s37
      %s41 = sphi 0, %s40
      %s57 = sphi 0, %s41
      %s61 = sphi 0, %s61
      %s63 = sphi 0, %s61
      %s64 = sphi 0, %s63
      %s78 = sphi 0, %s64
      %s82 = sphi 0, %s82
      %s84 = sphi 0, %s82
      %s85 = sphi 0, %s84
      %s99 = sphi 0, %s85
      %s103 = sphi 0, %s103
      %s105 = sphi 0, %s103
      %s106 = sphi 0, %s105
      %s120 = sphi 0, %s106
      %s124 = sphi 0, %s124
      %s126 = sphi 0, %s124
      %s127 = sphi 0, %s126
      %s141 = sphi 0, %s127
      %s145 = sphi 0, %s145
      %s147 = sphi 0, %s145
      %s148 = sphi 0, %s147
      %s162 = sphi 0, %s148
      %s166 = sphi 0, %s166
      %s168 = sphi 0, %s166
      %s169 = sphi 0, %s168
      %s183 = sphi 0, %s169
      %s187 = sphi 0, %s187
      %s189 = sphi 0, %s187
      %s190 = sphi 0, %s189
      %s204 = sphi 0, %s190
      %s208 = sphi 0, %s208
      %s210 = sphi 0, %s208
      %s211 = sphi 0, %s210
      %s225 = sphi 0, %s211
      %s229 = sphi 0, %s229
      %s231 = sphi 0, %s229
      %s232 = sphi 0, %s231
      %s246 = sphi 0, %s232
      %s250 = sphi 0, %s250
      %s252 = sphi 0, %s250
      %s253 = sphi 0, %s252
      %s267 = sphi 0, %s253
      %s271 = sphi 0, %s271
      %s273 = sphi 0, %s271
      %s274 = sphi 0, %s273
      %s288 = sphi 0, %s274
      %s292 = sphi 0, %s292
      %s294 = sphi 0, %s292
      %s295 = sphi 0, %s294
      %s309 = sphi 0, %s295
      %s313 = sphi 0, %s313
      %s315 = sphi 0, %s313
      %s316 = sphi 0, %s315
      %s330 = sphi 0, %s316
      %s334 = sphi 0, %s334
      %s336 = sphi 0, %s334
      %s337 = sphi 0, %s336
      %s351 = sphi 0, %s337
      %s357 = sphi 0, %s359
      %s360 = sphi 0, %s357
      %s361 = sphi 0, %s360
      %s377 = sphi 0, %s361
    $region4: #{tpu_custom_call.1} parent=1 // loop_header_branch
      %30 = sbr.rel (%p28) target = $region8
    $region5: #{tpu_custom_call.1} parent=1 // loop_body
      %s32 = ssub.s32 %s27, 1
      %s33 = ssub.s32 %s27, 2
      %s34 = sadd.s32 %s27, 1
      %s35 = ssub.s32 %s27, %s34
      %p36 = scmp.eq.s32.totalorder %s35, 0
      %s38 = sadd.s32 %s37, 1
      %s39 = scalar_select %p36, %s37, %s38
      %p42 = pneg %p36
      %p43 = scmp.eq.s32.totalorder %s27, 1
      %p44 = por %p42, %p43
      %p45 = scmp.ne.s32.totalorder %s37, %s40
      %p46 = scmp.eq.s32.totalorder %s27, 0
      %p47 = por %p45, %p46
      %p48 = scmp.ne.s32.totalorder %s37, %s40
      %p49 = scmp.eq.s32.totalorder %s32, 1
      %p50 = por %p48, %p49
      %p51 = scmp.ne.s32.totalorder %s40, %s41
      %p52 = scmp.eq.s32.totalorder %s32, 0
      %p53 = por %p51, %p52
      %p54 = scmp.ne.s32.totalorder %s40, %s41
      %p55 = scmp.eq.s32.totalorder %s33, 1
      %p56 = por %p54, %p55
      %p58 = scmp.ne.s32.totalorder %s41, %s57
      %p59 = scmp.eq.s32.totalorder %s33, 0
      %p60 = por %p58, %p59
      %s62 = sadd.s32 %s61, 1
      %p65 = scmp.eq.s32.totalorder %s27, 1
      %p66 = scmp.ne.s32.totalorder %s61, %s63
      %p67 = scmp.eq.s32.totalorder %s27, 0
      %p68 = por %p66, %p67
      %p69 = scmp.ne.s32.totalorder %s61, %s63
      %p70 = scmp.eq.s32.totalorder %s32, 1
      %p71 = por %p69, %p70
      %p72 = scmp.ne.s32.totalorder %s63, %s64
      %p73 = scmp.eq.s32.totalorder %s32, 0
      %p74 = por %p72, %p73
      %p75 = scmp.ne.s32.totalorder %s63, %s64
      %p76 = scmp.eq.s32.totalorder %s33, 1
      %p77 = por %p75, %p76
      %p79 = scmp.ne.s32.totalorder %s64, %s78
      %p80 = scmp.eq.s32.totalorder %s33, 0
      %p81 = por %p79, %p80
      %s83 = sadd.s32 %s82, 1
      %p86 = scmp.eq.s32.totalorder %s27, 1
      %p87 = scmp.ne.s32.totalorder %s82, %s84
      %p88 = scmp.eq.s32.totalorder %s27, 0
      %p89 = por %p87, %p88
      %p90 = scmp.ne.s32.totalorder %s82, %s84
      %p91 = scmp.eq.s32.totalorder %s32, 1
      %p92 = por %p90, %p91
      %p93 = scmp.ne.s32.totalorder %s84, %s85
      %p94 = scmp.eq.s32.totalorder %s32, 0
      %p95 = por %p93, %p94
      %p96 = scmp.ne.s32.totalorder %s84, %s85
      %p97 = scmp.eq.s32.totalorder %s33, 1
      %p98 = por %p96, %p97
      %p100 = scmp.ne.s32.totalorder %s85, %s99
      %p101 = scmp.eq.s32.totalorder %s33, 0
      %p102 = por %p100, %p101
      %s104 = sadd.s32 %s103, 1
      %p107 = scmp.eq.s32.totalorder %s27, 1
      %p108 = scmp.ne.s32.totalorder %s103, %s105
      %p109 = scmp.eq.s32.totalorder %s27, 0
      %p110 = por %p108, %p109
      %p111 = scmp.ne.s32.totalorder %s103, %s105
      %p112 = scmp.eq.s32.totalorder %s32, 1
      %p113 = por %p111, %p112
      %p114 = scmp.ne.s32.totalorder %s105, %s106
      %p115 = scmp.eq.s32.totalorder %s32, 0
      %p116 = por %p114, %p115
      %p117 = scmp.ne.s32.totalorder %s105, %s106
      %p118 = scmp.eq.s32.totalorder %s33, 1
      %p119 = por %p117, %p118
      %p121 = scmp.ne.s32.totalorder %s106, %s120
      %p122 = scmp.eq.s32.totalorder %s33, 0
      %p123 = por %p121, %p122
      %s125 = sadd.s32 %s124, 1
      %p128 = scmp.eq.s32.totalorder %s27, 1
      %p129 = scmp.ne.s32.totalorder %s124, %s126
      %p130 = scmp.eq.s32.totalorder %s27, 0
      %p131 = por %p129, %p130
      %p132 = scmp.ne.s32.totalorder %s124, %s126
      %p133 = scmp.eq.s32.totalorder %s32, 1
      %p134 = por %p132, %p133
      %p135 = scmp.ne.s32.totalorder %s126, %s127
      %p136 = scmp.eq.s32.totalorder %s32, 0
      %p137 = por %p135, %p136
      %p138 = scmp.ne.s32.totalorder %s126, %s127
      %p139 = scmp.eq.s32.totalorder %s33, 1
      %p140 = por %p138, %p139
      %p142 = scmp.ne.s32.totalorder %s127, %s141
      %p143 = scmp.eq.s32.totalorder %s33, 0
      %p144 = por %p142, %p143
      %s146 = sadd.s32 %s145, 1
      %p149 = scmp.eq.s32.totalorder %s27, 1
      %p150 = scmp.ne.s32.totalorder %s145, %s147
      %p151 = scmp.eq.s32.totalorder %s27, 0
      %p152 = por %p150, %p151
      %p153 = scmp.ne.s32.totalorder %s145, %s147
      %p154 = scmp.eq.s32.totalorder %s32, 1
      %p155 = por %p153, %p154
      %p156 = scmp.ne.s32.totalorder %s147, %s148
      %p157 = scmp.eq.s32.totalorder %s32, 0
      %p158 = por %p156, %p157
      %p159 = scmp.ne.s32.totalorder %s147, %s148
      %p160 = scmp.eq.s32.totalorder %s33, 1
      %p161 = por %p159, %p160
      %p163 = scmp.ne.s32.totalorder %s148, %s162
      %p164 = scmp.eq.s32.totalorder %s33, 0
      %p165 = por %p163, %p164
      %s167 = sadd.s32 %s166, 1
      %p170 = scmp.eq.s32.totalorder %s27, 1
      %p171 = scmp.ne.s32.totalorder %s166, %s168
      %p172 = scmp.eq.s32.totalorder %s27, 0
      %p173 = por %p171, %p172
      %p174 = scmp.ne.s32.totalorder %s166, %s168
      %p175 = scmp.eq.s32.totalorder %s32, 1
      %p176 = por %p174, %p175
      %p177 = scmp.ne.s32.totalorder %s168, %s169
      %p178 = scmp.eq.s32.totalorder %s32, 0
      %p179 = por %p177, %p178
      %p180 = scmp.ne.s32.totalorder %s168, %s169
      %p181 = scmp.eq.s32.totalorder %s33, 1
      %p182 = por %p180, %p181
      %p184 = scmp.ne.s32.totalorder %s169, %s183
      %p185 = scmp.eq.s32.totalorder %s33, 0
      %p186 = por %p184, %p185
      %s188 = sadd.s32 %s187, 1
      %p191 = scmp.eq.s32.totalorder %s27, 1
      %p192 = scmp.ne.s32.totalorder %s187, %s189
      %p193 = scmp.eq.s32.totalorder %s27, 0
      %p194 = por %p192, %p193
      %p195 = scmp.ne.s32.totalorder %s187, %s189
      %p196 = scmp.eq.s32.totalorder %s32, 1
      %p197 = por %p195, %p196
      %p198 = scmp.ne.s32.totalorder %s189, %s190
      %p199 = scmp.eq.s32.totalorder %s32, 0
      %p200 = por %p198, %p199
      %p201 = scmp.ne.s32.totalorder %s189, %s190
      %p202 = scmp.eq.s32.totalorder %s33, 1
      %p203 = por %p201, %p202
      %p205 = scmp.ne.s32.totalorder %s190, %s204
      %p206 = scmp.eq.s32.totalorder %s33, 0
      %p207 = por %p205, %p206
      %s209 = sadd.s32 %s208, 1
      %p212 = scmp.eq.s32.totalorder %s27, 1
      %p213 = scmp.ne.s32.totalorder %s208, %s210
      %p214 = scmp.eq.s32.totalorder %s27, 0
      %p215 = por %p213, %p214
      %p216 = scmp.ne.s32.totalorder %s208, %s210
      %p217 = scmp.eq.s32.totalorder %s32, 1
      %p218 = por %p216, %p217
      %p219 = scmp.ne.s32.totalorder %s210, %s211
      %p220 = scmp.eq.s32.totalorder %s32, 0
      %p221 = por %p219, %p220
      %p222 = scmp.ne.s32.totalorder %s210, %s211
      %p223 = scmp.eq.s32.totalorder %s33, 1
      %p224 = por %p222, %p223
      %p226 = scmp.ne.s32.totalorder %s211, %s225
      %p227 = scmp.eq.s32.totalorder %s33, 0
      %p228 = por %p226, %p227
      %s230 = sadd.s32 %s229, 1
      %p233 = scmp.eq.s32.totalorder %s27, 1
      %p234 = scmp.ne.s32.totalorder %s229, %s231
      %p235 = scmp.eq.s32.totalorder %s27, 0
      %p236 = por %p234, %p235
      %p237 = scmp.ne.s32.totalorder %s229, %s231
      %p238 = scmp.eq.s32.totalorder %s32, 1
      %p239 = por %p237, %p238
      %p240 = scmp.ne.s32.totalorder %s231, %s232
      %p241 = scmp.eq.s32.totalorder %s32, 0
      %p242 = por %p240, %p241
      %p243 = scmp.ne.s32.totalorder %s231, %s232
      %p244 = scmp.eq.s32.totalorder %s33, 1
      %p245 = por %p243, %p244
      %p247 = scmp.ne.s32.totalorder %s232, %s246
      %p248 = scmp.eq.s32.totalorder %s33, 0
      %p249 = por %p247, %p248
      %s251 = sadd.s32 %s250, 1
      %p254 = scmp.eq.s32.totalorder %s27, 1
      %p255 = scmp.ne.s32.totalorder %s250, %s252
      %p256 = scmp.eq.s32.totalorder %s27, 0
      %p257 = por %p255, %p256
      %p258 = scmp.ne.s32.totalorder %s250, %s252
      %p259 = scmp.eq.s32.totalorder %s32, 1
      %p260 = por %p258, %p259
      %p261 = scmp.ne.s32.totalorder %s252, %s253
      %p262 = scmp.eq.s32.totalorder %s32, 0
      %p263 = por %p261, %p262
      %p264 = scmp.ne.s32.totalorder %s252, %s253
      %p265 = scmp.eq.s32.totalorder %s33, 1
      %p266 = por %p264, %p265
      %p268 = scmp.ne.s32.totalorder %s253, %s267
      %p269 = scmp.eq.s32.totalorder %s33, 0
      %p270 = por %p268, %p269
      %s272 = sadd.s32 %s271, 1
      %p275 = scmp.eq.s32.totalorder %s27, 1
      %p276 = scmp.ne.s32.totalorder %s271, %s273
      %p277 = scmp.eq.s32.totalorder %s27, 0
      %p278 = por %p276, %p277
      %p279 = scmp.ne.s32.totalorder %s271, %s273
      %p280 = scmp.eq.s32.totalorder %s32, 1
      %p281 = por %p279, %p280
      %p282 = scmp.ne.s32.totalorder %s273, %s274
      %p283 = scmp.eq.s32.totalorder %s32, 0
      %p284 = por %p282, %p283
      %p285 = scmp.ne.s32.totalorder %s273, %s274
      %p286 = scmp.eq.s32.totalorder %s33, 1
      %p287 = por %p285, %p286
      %p289 = scmp.ne.s32.totalorder %s274, %s288
      %p290 = scmp.eq.s32.totalorder %s33, 0
      %p291 = por %p289, %p290
      %s293 = sadd.s32 %s292, 1
      %p296 = scmp.eq.s32.totalorder %s27, 1
      %p297 = scmp.ne.s32.totalorder %s292, %s294
      %p298 = scmp.eq.s32.totalorder %s27, 0
      %p299 = por %p297, %p298
      %p300 = scmp.ne.s32.totalorder %s292, %s294
      %p301 = scmp.eq.s32.totalorder %s32, 1
      %p302 = por %p300, %p301
      %p303 = scmp.ne.s32.totalorder %s294, %s295
      %p304 = scmp.eq.s32.totalorder %s32, 0
      %p305 = por %p303, %p304
      %p306 = scmp.ne.s32.totalorder %s294, %s295
      %p307 = scmp.eq.s32.totalorder %s33, 1
      %p308 = por %p306, %p307
      %p310 = scmp.ne.s32.totalorder %s295, %s309
      %p311 = scmp.eq.s32.totalorder %s33, 0
      %p312 = por %p310, %p311
      %s314 = sadd.s32 %s313, 1
      %p317 = scmp.eq.s32.totalorder %s27, 1
      %p318 = scmp.ne.s32.totalorder %s313, %s315
      %p319 = scmp.eq.s32.totalorder %s27, 0
      %p320 = por %p318, %p319
      %p321 = scmp.ne.s32.totalorder %s313, %s315
      %p322 = scmp.eq.s32.totalorder %s32, 1
      %p323 = por %p321, %p322
      %p324 = scmp.ne.s32.totalorder %s315, %s316
      %p325 = scmp.eq.s32.totalorder %s32, 0
      %p326 = por %p324, %p325
      %p327 = scmp.ne.s32.totalorder %s315, %s316
      %p328 = scmp.eq.s32.totalorder %s33, 1
      %p329 = por %p327, %p328
      %p331 = scmp.ne.s32.totalorder %s316, %s330
      %p332 = scmp.eq.s32.totalorder %s33, 0
      %p333 = por %p331, %p332
      %s335 = sadd.s32 %s334, 1
      %p338 = scmp.eq.s32.totalorder %s27, 1
      %p339 = scmp.ne.s32.totalorder %s334, %s336
      %p340 = scmp.eq.s32.totalorder %s27, 0
      %p341 = por %p339, %p340
      %p342 = scmp.ne.s32.totalorder %s334, %s336
      %p343 = scmp.eq.s32.totalorder %s32, 1
      %p344 = por %p342, %p343
      %p345 = scmp.ne.s32.totalorder %s336, %s337
      %p346 = scmp.eq.s32.totalorder %s32, 0
      %p347 = por %p345, %p346
      %p348 = scmp.ne.s32.totalorder %s336, %s337
      %p349 = scmp.eq.s32.totalorder %s33, 1
      %p350 = por %p348, %p349
      %p352 = scmp.ne.s32.totalorder %s337, %s351
      %p353 = scmp.eq.s32.totalorder %s33, 0
      %p354 = por %p352, %p353
      %s355 = ssub.s32 %s27, %s34
      %p356 = scmp.eq.s32.totalorder %s355, 0
      %s358 = sadd.s32 %s357, 1
      %s359 = scalar_select %p356, %s357, %s358
      %p362 = pneg %p356
      %p363 = scmp.eq.s32.totalorder %s27, 1
      %p364 = por %p362, %p363
      %p365 = scmp.ne.s32.totalorder %s357, %s360
      %p366 = scmp.eq.s32.totalorder %s27, 0
      %p367 = por %p365, %p366
      %p368 = scmp.ne.s32.totalorder %s357, %s360
      %p369 = scmp.eq.s32.totalorder %s32, 1
      %p370 = por %p368, %p369
      %p371 = scmp.ne.s32.totalorder %s360, %s361
      %p372 = scmp.eq.s32.totalorder %s32, 0
      %p373 = por %p371, %p372
      %p374 = scmp.ne.s32.totalorder %s360, %s361
      %p375 = scmp.eq.s32.totalorder %s33, 1
      %p376 = por %p374, %p375
      %p378 = scmp.ne.s32.totalorder %s361, %s377
      %p379 = scmp.eq.s32.totalorder %s33, 0
      %p380 = por %p378, %p379
      %p381 = scmp.le.s32.totalorder 1, %s27
      %p382 = scmp.lt.s32.totalorder %s27, 3
      %p383 = pnand %p381, %p382
      %p384 = pneg %p383
      // Predicated region
      $region9: #{tpu_custom_call.1} parent=5 // pred_check
        _
      $region10: #{tpu_custom_call.1} parent=5 // pred_check_branch
        %386 = sbr.rel (%p383) target = $region12
      $region11: #{tpu_custom_call.1} parent=5 // pred_region
        %s387 = ssub.s32 %s27, 1
        // Predicated region
        $region13: #{tpu_custom_call.1} parent=11 // pred_check
          %p388 = pneg %p74
        $region14: #{tpu_custom_call.1} parent=11 // pred_check_branch
          %390 = sbr.rel (%p388) target = $region16
        $region15: #{tpu_custom_call.1} parent=11 // pred_region
          _
        $region16: #{tpu_custom_call.1} parent=11 // pred_fallthru
          _
        // Predicated region
        $region17: #{tpu_custom_call.1} parent=11 // pred_check
          %p391 = pneg %p95
        $region18: #{tpu_custom_call.1} parent=11 // pred_check_branch
          %393 = sbr.rel (%p391) target = $region20
        $region19: #{tpu_custom_call.1} parent=11 // pred_region
          _
        $region20: #{tpu_custom_call.1} parent=11 // pred_fallthru
          _
        // Predicated region
        $region21: #{tpu_custom_call.1} parent=11 // pred_check
          %p394 = pneg %p116
        $region22: #{tpu_custom_call.1} parent=11 // pred_check_branch
          %396 = sbr.rel (%p394) target = $region24
        $region23: #{tpu_custom_call.1} parent=11 // pred_region
          _
        $region24: #{tpu_custom_call.1} parent=11 // pred_fallthru
          _
        // Predicated region
        $region25: #{tpu_custom_call.1} parent=11 // pred_check
          %p397 = pneg %p137
        $region26: #{tpu_custom_call.1} parent=11 // pred_check_branch
          %399 = sbr.rel (%p397) target = $region28
        $region27: #{tpu_custom_call.1} parent=11 // pred_region
          %s401 = ssub.s32 16, 16
          %402 = vsyncadd [#allocation5], %s401
          %s404 = sshll.u32 [#allocation4], 4
          %s405 = int_to_ptr.vmem [resolvable:$true] %s404
          %407 = dma.hbm_to_vmem [thread:$0]  %s4, 16, %s405, [#allocation5]
        $region28: #{tpu_custom_call.1} parent=11 // pred_fallthru
          _
        // Predicated region
        $region29: #{tpu_custom_call.1} parent=11 // pred_check
          %p408 = pneg %p158
        $region30: #{tpu_custom_call.1} parent=11 // pred_check_branch
          %410 = sbr.rel (%p408) target = $region32
        $region31: #{tpu_custom_call.1} parent=11 // pred_region
          _
        $region32: #{tpu_custom_call.1} parent=11 // pred_fallthru
          _
        // Predicated region
        $region33: #{tpu_custom_call.1} parent=11 // pred_check
          %p411 = pneg %p179
        $region34: #{tpu_custom_call.1} parent=11 // pred_check_branch
          %413 = sbr.rel (%p411) target = $region36
        $region35: #{tpu_custom_call.1} parent=11 // pred_region
          %s415 = ssub.s32 16, 16
          %416 = vsyncadd [#allocation8], %s415
          %s418 = sshll.u32 [#allocation7], 4
          %s419 = int_to_ptr.vmem [resolvable:$true] %s418
          %421 = dma.hbm_to_vmem [thread:$0]  %s6, 16, %s419, [#allocation8]
        $region36: #{tpu_custom_call.1} parent=11 // pred_fallthru
          _
        // Predicated region
        $region37: #{tpu_custom_call.1} parent=11 // pred_check
          %p422 = pneg %p200
        $region38: #{tpu_custom_call.1} parent=11 // pred_check_branch
          %424 = sbr.rel (%p422) target = $region40
        $region39: #{tpu_custom_call.1} parent=11 // pred_region
          %s426 = ssub.s32 16, 16
          %427 = vsyncadd [#allocation8], %s426
          %s429 = sshll.u32 [#allocation9], 4
          %s430 = int_to_ptr.vmem [resolvable:$true] %s429
          %432 = dma.hbm_to_vmem [thread:$0]  %s7, 16, %s430, [#allocation8]
        $region40: #{tpu_custom_call.1} parent=11 // pred_fallthru
          _
        // Predicated region
        $region41: #{tpu_custom_call.1} parent=11 // pred_check
          %p433 = pneg %p221
        $region42: #{tpu_custom_call.1} parent=11 // pred_check_branch
          %435 = sbr.rel (%p433) target = $region44
        $region43: #{tpu_custom_call.1} parent=11 // pred_region
          %s437 = ssub.s32 16, 16
          %438 = vsyncadd [#allocation11], %s437
          %s440 = sshll.u32 [#allocation10], 4
          %s441 = int_to_ptr.vmem [resolvable:$true] %s440
          %443 = dma.hbm_to_vmem [thread:$0]  %s8, 16, %s441, [#allocation11]
        $region44: #{tpu_custom_call.1} parent=11 // pred_fallthru
          _
        // Predicated region
        $region45: #{tpu_custom_call.1} parent=11 // pred_check
          %p444 = pneg %p242
        $region46: #{tpu_custom_call.1} parent=11 // pred_check_branch
          %446 = sbr.rel (%p444) target = $region48
        $region47: #{tpu_custom_call.1} parent=11 // pred_region
          %s448 = ssub.s32 16, 16
          %449 = vsyncadd [#allocation11], %s448
          %s451 = sshll.u32 [#allocation12], 4
          %s452 = int_to_ptr.vmem [resolvable:$true] %s451
          %454 = dma.hbm_to_vmem [thread:$0]  %s9, 16, %s452, [#allocation11]
        $region48: #{tpu_custom_call.1} parent=11 // pred_fallthru
          _
        // Predicated region
        $region49: #{tpu_custom_call.1} parent=11 // pred_check
          %p455 = pneg %p263
        $region50: #{tpu_custom_call.1} parent=11 // pred_check_branch
          %457 = sbr.rel (%p455) target = $region52
        $region51: #{tpu_custom_call.1} parent=11 // pred_region
          _
        $region52: #{tpu_custom_call.1} parent=11 // pred_fallthru
          _
        // Predicated region
        $region53: #{tpu_custom_call.1} parent=11 // pred_check
          %p458 = pneg %p284
        $region54: #{tpu_custom_call.1} parent=11 // pred_check_branch
          %460 = sbr.rel (%p458) target = $region56
        $region55: #{tpu_custom_call.1} parent=11 // pred_region
          _
        $region56: #{tpu_custom_call.1} parent=11 // pred_fallthru
          _
        // Predicated region
        $region57: #{tpu_custom_call.1} parent=11 // pred_check
          %p461 = pneg %p305
        $region58: #{tpu_custom_call.1} parent=11 // pred_check_branch
          %463 = sbr.rel (%p461) target = $region60
        $region59: #{tpu_custom_call.1} parent=11 // pred_region
          _
        $region60: #{tpu_custom_call.1} parent=11 // pred_fallthru
          _
        // Predicated region
        $region61: #{tpu_custom_call.1} parent=11 // pred_check
          %p464 = pneg %p326
        $region62: #{tpu_custom_call.1} parent=11 // pred_check_branch
          %466 = sbr.rel (%p464) target = $region64
        $region63: #{tpu_custom_call.1} parent=11 // pred_region
          _
        $region64: #{tpu_custom_call.1} parent=11 // pred_fallthru
          _
        // Predicated region
        $region65: #{tpu_custom_call.1} parent=11 // pred_check
          %p467 = pneg %p347
        $region66: #{tpu_custom_call.1} parent=11 // pred_check_branch
          %469 = sbr.rel (%p467) target = $region68
        $region67: #{tpu_custom_call.1} parent=11 // pred_region
          _
        $region68: #{tpu_custom_call.1} parent=11 // pred_fallthru
          _
      $region12: #{tpu_custom_call.1} parent=5 // pred_fallthru
        _
      %p470 = scmp.lt.s32.totalorder %s27, 2
      // Predicated region
      $region69: #{tpu_custom_call.1} parent=5 // pred_check
        %p471 = pneg %p470
      $region70: #{tpu_custom_call.1} parent=5 // pred_check_branch
        %473 = sbr.rel (%p471) target = $region72
      $region71: #{tpu_custom_call.1} parent=5 // pred_region
        // Predicated region
        $region73: #{tpu_custom_call.1} parent=71 // pred_check
          %p474 = pneg %p47
        $region74: #{tpu_custom_call.1} parent=71 // pred_check_branch
          %476 = sbr.rel (%p474) target = $region76
        $region75: #{tpu_custom_call.1} parent=71 // pred_region
          %p477 = scmp.lt.s32.totalorder %s27, 1
          %s478 = scalar_select %p477, %s27, 1
          %s479 = smul.addr %s478, 8
          %s480 = scalar_lea.vmem %s0, %s479
        $region76: #{tpu_custom_call.1} parent=71 // pred_fallthru
          _
      $region72: #{tpu_custom_call.1} parent=5 // pred_fallthru
        _
      %p481 = scmp.le.s32.totalorder 1, %s27
      %p482 = scmp.lt.s32.totalorder %s27, 3
      %p483 = pnand %p481, %p482
      %p484 = pneg %p483
      // Predicated region
      $region77: #{tpu_custom_call.1} parent=5 // pred_check
        _
      $region78: #{tpu_custom_call.1} parent=5 // pred_check_branch
        %486 = sbr.rel (%p483) target = $region80
      $region79: #{tpu_custom_call.1} parent=5 // pred_region
        %s487 = ssub.s32 %s27, 1
        // Predicated region
        $region81: #{tpu_custom_call.1} parent=79 // pred_check
          %p488 = pneg %p137
        $region82: #{tpu_custom_call.1} parent=79 // pred_check_branch
          %490 = sbr.rel (%p488) target = $region84
        $region83: #{tpu_custom_call.1} parent=79 // pred_region
          %491 = dma.done [#allocation5], 16
        $region84: #{tpu_custom_call.1} parent=79 // pred_fallthru
          _
        // Predicated region
        $region85: #{tpu_custom_call.1} parent=79 // pred_check
          %p492 = pneg %p179
        $region86: #{tpu_custom_call.1} parent=79 // pred_check_branch
          %494 = sbr.rel (%p492) target = $region88
        $region87: #{tpu_custom_call.1} parent=79 // pred_region
          %495 = dma.done [#allocation8], 16
        $region88: #{tpu_custom_call.1} parent=79 // pred_fallthru
          _
        // Predicated region
        $region89: #{tpu_custom_call.1} parent=79 // pred_check
          %p496 = pneg %p200
        $region90: #{tpu_custom_call.1} parent=79 // pred_check_branch
          %498 = sbr.rel (%p496) target = $region92
        $region91: #{tpu_custom_call.1} parent=79 // pred_region
          %499 = dma.done [#allocation8], 16
        $region92: #{tpu_custom_call.1} parent=79 // pred_fallthru
          _
        // Predicated region
        $region93: #{tpu_custom_call.1} parent=79 // pred_check
          %p500 = pneg %p221
        $region94: #{tpu_custom_call.1} parent=79 // pred_check_branch
          %502 = sbr.rel (%p500) target = $region96
        $region95: #{tpu_custom_call.1} parent=79 // pred_region
          %503 = dma.done [#allocation11], 16
        $region96: #{tpu_custom_call.1} parent=79 // pred_fallthru
          _
        // Predicated region
        $region97: #{tpu_custom_call.1} parent=79 // pred_check
          %p504 = pneg %p242
        $region98: #{tpu_custom_call.1} parent=79 // pred_check_branch
          %506 = sbr.rel (%p504) target = $region100
        $region99: #{tpu_custom_call.1} parent=79 // pred_region
          %507 = dma.done [#allocation11], 16
        $region100: #{tpu_custom_call.1} parent=79 // pred_fallthru
          _
        %p508 = scmp.lt.s32.totalorder %s32, 1
        %s509 = scalar_select %p508, %s32, 1
        %s510 = smul.addr %s509, 8
        %s511 = scalar_lea.vmem %s0, %s510
        %p512 = pneg %p53
        %p513 = pneg %p50
        %p514 = pneg %p74
        %p515 = pneg %p71
        %p516 = pneg %p95
        %p517 = pneg %p92
        %p518 = pneg %p116
        %p519 = pneg %p113
        %p520 = pneg %p137
        %p521 = pneg %p134
        %p522 = pneg %p158
        %p523 = pneg %p155
        %p524 = pneg %p179
        %p525 = pneg %p176
        %p526 = pneg %p200
        %p527 = pneg %p197
        %p528 = pneg %p221
        %p529 = pneg %p218
        %p530 = pneg %p242
        %p531 = pneg %p239
        %p532 = pneg %p263
        %p533 = pneg %p260
        %p534 = pneg %p284
        %p535 = pneg %p281
        %p536 = pneg %p305
        %p537 = pneg %p302
        %p538 = pneg %p326
        %p539 = pneg %p323
        %p540 = pneg %p347
        %p541 = pneg %p344
        %p542 = pneg %p373
        %p543 = pneg %p370
        %s544 = sand.u32 %s360, 1
        %s545 = scalar_lea.sflag [#allocation6], %s544
        %s546 = sand.u32 %s360, 1
        %s547 = smul.addr %s546, 8
        %s548 = scalar_lea.vmem [#allocation13], %s547
        %p549 = scmp.lt.s32.totalorder %s32, 1
        %s550 = scalar_select %p549, %s32, 1
        %s551 = smul.addr %s550, 8
        %s552 = scalar_lea.vmem %s0, %s551
        %v554 = vld [vmem:[%s1] sm:$0x1]
        %v555 = vld [vmem:[%s2] sm:$0x1]
        %v556 = vld [vmem:[#allocation9] sm:$0x1]
        %v557 = vld [vmem:[#allocation10] sm:$0x1]
        %v558 = vld [vmem:[#allocation12] sm:$0x1]
        %v559 = vld [vmem:[%s10] sm:$0x1]
        %v560 = vld [vmem:[#allocation4] sm:$0x1]
        %v561 = vld [vmem:[#allocation7] sm:$0x1]
        %v562 = vld [vmem:[%s12] sm:$0x1]
        %v563 = vld [vmem:[%s14] sm:$0x1]
        %v564 = vld [vmem:[%s552] sm:$0xff]
        %vm565 = vcmask 261120
        %v566 = vsel %vm565, %v564, 0.0
        %567 = vadd.xlane.f32.xlu0 %v566
        %v568 = vpop.xlane.xlu0 %567
        %v569 = vrcp.pop 32.0
        %v570 = vmul.f32 %v568, %v569
        %v571 = vsub.f32 %v564, %v570
        %v572 = vmul.f32 %v571, %v571
        %v573 = vsel %vm565, %v572, 0.0
        %574 = vadd.xlane.f32.xlu0 %v573
        %v575 = vpop.xlane.xlu0 %574
        %v576 = vmul.f32 %v575, %v569
        %v577 = vadd.f32 %v576, 1e-12
        %v578 = vrsqrt.pop %v577
        %v579 = vmul.f32 %v571, %v578
        %v581 = vlaneseq
        %v582 = vshrl.u32 %v581, 7
        %v583 = vsub.s32 0, %v582
        %v584 = vrot.slane %v554, %v583
        %v586 = vmul.f32 %v579, %v584
        %v588 = vlaneseq
        %v589 = vshrl.u32 %v588, 7
        %v590 = vsub.s32 0, %v589
        %v591 = vrot.slane %v555, %v590
        %v593 = vadd.f32 %v586, %v591
        %v594 = vpack.c.bf16 %v593, %v593
        %v595 = vld [vmem:[%s3] sm:$0xf]
        %v596 = vld [vmem:[%s3 + $0x4] sm:$0xf]
        %v597 = vld [vmem:[%s3 + $0x8] sm:$0xf]
        %v598 = vld [vmem:[%s3 + $0xc] sm:$0xf]
        %v600 = vlaneseq
        %v601 = vshrl.u32 %v600, 7
        %v602 = vsub.s32 0, %v601
        %v603 = vrot.slane %v560, %v602
        %v609 = vunpack.c.l.b16 %v595
        %v610 = vunpack.c.l.b16 %v596
        %v611 = vunpack.c.l.b16 %v597
        %v612 = vunpack.c.l.b16 %v598
        %v613 = vpack.c.b16 %v610, %v609
        %v614 = vpack.c.b16 %v612, %v611
        %v618 = vsel %vm565, %v594, 0
        %620 = vmatprep.subr.bf16.mxu0 0
        %621 = vmatpush1.bf16.msra.mxu0 %v613
        %622 = vmatprep.subr.bf16.mxu0 0
        %623 = vmatpush1.bf16.msra.mxu0 %v614
        %624 = vmatprep.subr.bf16.mxu0 0
        %625 = vmatpush1.bf16.msra.mxu0 0
        %626 = vmatprep.subr.bf16.mxu0 0
        %627 = vmatpush1.bf16.msra.mxu0 0
        %628 = vmatprep.subr.bf16.mxu0 0
        %629 = vmatpush1.bf16.msra.mxu0 0
        %630 = vmatprep.subr.bf16.mxu0 0
        %631 = vmatpush1.bf16.msra.mxu0 0
        %632 = vmatprep.subr.bf16.mxu0 0
        %633 = vmatpush1.bf16.msra.mxu0 0
        %634 = vmatprep.subr.bf16.mxu0 0
        %635 = vmatpush1.bf16.msra.mxu0 0
        %636 = vmatprep.subr.bf16.mxu0 0
        %637 = vmatpush1.bf16.msra.mxu0 0
        %638 = vmatprep.subr.bf16.mxu0 0
        %639 = vmatpush1.bf16.msra.mxu0 0
        %640 = vmatprep.subr.bf16.mxu0 0
        %641 = vmatpush1.bf16.msra.mxu0 0
        %642 = vmatprep.subr.bf16.mxu0 0
        %643 = vmatpush1.bf16.msra.mxu0 0
        %644 = vmatprep.subr.bf16.mxu0 0
        %645 = vmatpush1.bf16.msra.mxu0 0
        %646 = vmatprep.subr.bf16.mxu0 0
        %647 = vmatpush1.bf16.msra.mxu0 0
        %648 = vmatprep.subr.bf16.mxu0 0
        %649 = vmatpush1.bf16.msra.mxu0 0
        %650 = vmatprep.subr.bf16.mxu0 0
        %651 = vmatpush1.bf16.msra.mxu0 0
        %652 = vmatprep.mubr.bf16.mxu0 0
        %653 = vmatmul.mubr.bf16.gmra.mrb[0].mxu0 %v618
        %v654 = vpop.f32.mrb[0].mxu0
        %v655 = vadd.f32 %v603, %v654
        %v656 = vpop.f32.mrb[0].mxu0
        %v657 = vpop.f32.mrb[0].mxu0
        %v658 = vpop.f32.mrb[0].mxu0
        %659 = vdwg.mxu0
        %v660 = vpack.c.bf16 %v655, %v655
        %vm661 = vcmask 781312
        %662 = vst.msk [vmem:[#allocation2] sm:$0xf] %vm661, %v660
        %v663 = vld [vmem:[#allocation2] sm:$0xf]
        %v665 = vunpack.c.l.b16 %v663
        %v666 = vpack.c.b16 %v665, %v665
        %667 = vrot.lane.b32.xlu0 %v666, 96
        %v668 = vpop.permute.xlu0 %667
        %vm669 = vcmask 64512
        %v671 = vsel %vm669, %v663, 0
        %v674 = vsel %vm669, %v668, 0
        %676 = vmatprep.subr.bf16.mxu0 0
        %677 = vmatpush1.bf16.xpose.msra.mxu0 %v674
        %678 = vmatprep.subr.bf16.mxu0 0
        %679 = vmatpush1.bf16.xpose.msra.mxu0 0
        %680 = vmatprep.subr.bf16.mxu0 0
        %681 = vmatpush1.bf16.xpose.msra.mxu0 0
        %682 = vmatprep.subr.bf16.mxu0 0
        %683 = vmatpush1.bf16.xpose.msra.mxu0 0
        %684 = vmatprep.subr.bf16.mxu0 0
        %685 = vmatpush1.bf16.xpose.msra.mxu0 0
        %686 = vmatprep.subr.bf16.mxu0 0
        %687 = vmatpush1.bf16.xpose.msra.mxu0 0
        %688 = vmatprep.subr.bf16.mxu0 0
        %689 = vmatpush1.bf16.xpose.msra.mxu0 0
        %690 = vmatprep.subr.bf16.mxu0 0
        %691 = vmatpush1.bf16.xpose.msra.mxu0 0
        %692 = vmatprep.subr.bf16.mxu0 0
        %693 = vmatpush1.bf16.xpose.msra.mxu0 0
        %694 = vmatprep.subr.bf16.mxu0 0
        %695 = vmatpush1.bf16.xpose.msra.mxu0 0
        %696 = vmatprep.subr.bf16.mxu0 0
        %697 = vmatpush1.bf16.xpose.msra.mxu0 0
        %698 = vmatprep.subr.bf16.mxu0 0
        %699 = vmatpush1.bf16.xpose.msra.mxu0 0
        %700 = vmatprep.subr.bf16.mxu0 0
        %701 = vmatpush1.bf16.xpose.msra.mxu0 0
        %702 = vmatprep.subr.bf16.mxu0 0
        %703 = vmatpush1.bf16.xpose.msra.mxu0 0
        %704 = vmatprep.subr.bf16.mxu0 0
        %705 = vmatpush1.bf16.xpose.msra.mxu0 0
        %706 = vmatprep.subr.bf16.mxu0 0
        %707 = vmatpush1.bf16.xpose.msra.mxu0 0
        %708 = vmatprep.mubr.bf16.mxu0 0
        %709 = vmatmul.mubr.bf16.gmra.mrb[0].mxu0 %v671
        %v710 = vpop.f32.mrb[0].mxu0
        %v711 = vadd.f32 0.0, %v710
        %v712 = vpop.f32.mrb[0].mxu0
        %v713 = vpop.f32.mrb[0].mxu0
        %v714 = vpop.f32.mrb[0].mxu0
        %715 = vdwg.mxu0
        %v716 = vsel %vm669, %v711, -inf
        %717 = vmax.xlane.f32.xlu0 %v716
        %v718 = vpop.xlane.xlu0 %717
        %v719 = vsub.f32 %v711, %v718
        %v720 = vmul.f32 %v719, 1.442695
        %v721 = vpow.pop %v720
        %v722 = vsel %vm669, %v721, 0.0
        %723 = vadd.xlane.f32.xlu0 %v722
        %v724 = vpop.xlane.xlu0 %723
        %v725 = vrcp.pop %v724
        %v726 = vmul.f32 %v721, %v725
        %v727 = vpack.c.bf16 %v726, %v726
        %728 = vrot.lane.b32.xlu0 %v666, 64
        %v729 = vpop.permute.xlu0 %728
        %v731 = vsel %vm669, %v727, 0
        %vm733 = vcmask 1043456
        %v735 = vsel %vm733, %v729, 0
        %737 = vmatprep.subr.bf16.mxu0 0
        %738 = vmatpush1.bf16.msra.mxu0 %v735
        %739 = vmatprep.subr.bf16.mxu0 0
        %740 = vmatpush1.bf16.msra.mxu0 0
        %741 = vmatprep.subr.bf16.mxu0 0
        %742 = vmatpush1.bf16.msra.mxu0 0
        %743 = vmatprep.subr.bf16.mxu0 0
        %744 = vmatpush1.bf16.msra.mxu0 0
        %745 = vmatprep.subr.bf16.mxu0 0
        %746 = vmatpush1.bf16.msra.mxu0 0
        %747 = vmatprep.subr.bf16.mxu0 0
        %748 = vmatpush1.bf16.msra.mxu0 0
        %749 = vmatprep.subr.bf16.mxu0 0
        %750 = vmatpush1.bf16.msra.mxu0 0
        %751 = vmatprep.subr.bf16.mxu0 0
        %752 = vmatpush1.bf16.msra.mxu0 0
        %753 = vmatprep.subr.bf16.mxu0 0
        %754 = vmatpush1.bf16.msra.mxu0 0
        %755 = vmatprep.subr.bf16.mxu0 0
        %756 = vmatpush1.bf16.msra.mxu0 0
        %757 = vmatprep.subr.bf16.mxu0 0
        %758 = vmatpush1.bf16.msra.mxu0 0
        %759 = vmatprep.subr.bf16.mxu0 0
        %760 = vmatpush1.bf16.msra.mxu0 0
        %761 = vmatprep.subr.bf16.mxu0 0
        %762 = vmatpush1.bf16.msra.mxu0 0
        %763 = vmatprep.subr.bf16.mxu0 0
        %764 = vmatpush1.bf16.msra.mxu0 0
        %765 = vmatprep.subr.bf16.mxu0 0
        %766 = vmatpush1.bf16.msra.mxu0 0
        %767 = vmatprep.subr.bf16.mxu0 0
        %768 = vmatpush1.bf16.msra.mxu0 0
        %769 = vmatprep.mubr.bf16.mxu0 0
        %770 = vmatmul.mubr.bf16.gmra.mrb[0].mxu0 %v731
        %v771 = vpop.f32.mrb[0].mxu0
        %v772 = vadd.f32 0.0, %v771
        %v773 = vpop.f32.mrb[0].mxu0
        %v774 = vpop.f32.mrb[0].mxu0
        %v775 = vpop.f32.mrb[0].mxu0
        %776 = vdwg.mxu0
        %v777 = vpack.c.bf16 %v772, %v772
        %vm778 = vcmask 60416
        %779 = vst.msk [vmem:[#allocation3] sm:$0xf] %vm778, %v777
        %v780 = vld [vmem:[#allocation2] sm:$0xf]
        %v782 = vunpack.c.l.b16 %v780
        %v783 = vpack.c.b16 %v782, %v782
        %784 = vrot.lane.b32.xlu0 %v783, 120
        %v785 = vpop.permute.xlu0 %784
        %786 = vrot.lane.b32.xlu0 %v783, 88
        %v787 = vpop.permute.xlu0 %786
        %v789 = vsel %vm669, %v785, 0
        %v792 = vsel %vm669, %v787, 0
        %794 = vmatprep.subr.bf16.mxu0 0
        %795 = vmatpush1.bf16.xpose.msra.mxu0 %v792
        %796 = vmatprep.subr.bf16.mxu0 0
        %797 = vmatpush1.bf16.xpose.msra.mxu0 0
        %798 = vmatprep.subr.bf16.mxu0 0
        %799 = vmatpush1.bf16.xpose.msra.mxu0 0
        %800 = vmatprep.subr.bf16.mxu0 0
        %801 = vmatpush1.bf16.xpose.msra.mxu0 0
        %802 = vmatprep.subr.bf16.mxu0 0
        %803 = vmatpush1.bf16.xpose.msra.mxu0 0
        %804 = vmatprep.subr.bf16.mxu0 0
        %805 = vmatpush1.bf16.xpose.msra.mxu0 0
        %806 = vmatprep.subr.bf16.mxu0 0
        %807 = vmatpush1.bf16.xpose.msra.mxu0 0
        %808 = vmatprep.subr.bf16.mxu0 0
        %809 = vmatpush1.bf16.xpose.msra.mxu0 0
        %810 = vmatprep.subr.bf16.mxu0 0
        %811 = vmatpush1.bf16.xpose.msra.mxu0 0
        %812 = vmatprep.subr.bf16.mxu0 0
        %813 = vmatpush1.bf16.xpose.msra.mxu0 0
        %814 = vmatprep.subr.bf16.mxu0 0
        %815 = vmatpush1.bf16.xpose.msra.mxu0 0
        %816 = vmatprep.subr.bf16.mxu0 0
        %817 = vmatpush1.bf16.xpose.msra.mxu0 0
        %818 = vmatprep.subr.bf16.mxu0 0
        %819 = vmatpush1.bf16.xpose.msra.mxu0 0
        %820 = vmatprep.subr.bf16.mxu0 0
        %821 = vmatpush1.bf16.xpose.msra.mxu0 0
        %822 = vmatprep.subr.bf16.mxu0 0
        %823 = vmatpush1.bf16.xpose.msra.mxu0 0
        %824 = vmatprep.subr.bf16.mxu0 0
        %825 = vmatpush1.bf16.xpose.msra.mxu0 0
        %826 = vmatprep.mubr.bf16.mxu0 0
        %827 = vmatmul.mubr.bf16.gmra.mrb[0].mxu0 %v789
        %v828 = vpop.f32.mrb[0].mxu0
        %v829 = vadd.f32 0.0, %v828
        %v830 = vpop.f32.mrb[0].mxu0
        %v831 = vpop.f32.mrb[0].mxu0
        %v832 = vpop.f32.mrb[0].mxu0
        %833 = vdwg.mxu0
        %v834 = vsel %vm669, %v829, -inf
        %835 = vmax.xlane.f32.xlu0 %v834
        %v836 = vpop.xlane.xlu0 %835
        %v837 = vsub.f32 %v829, %v836
        %v838 = vmul.f32 %v837, 1.442695
        %v839 = vpow.pop %v838
        %v840 = vsel %vm669, %v839, 0.0
        %841 = vadd.xlane.f32.xlu0 %v840
        %v842 = vpop.xlane.xlu0 %841
        %v843 = vrcp.pop %v842
        %v844 = vmul.f32 %v839, %v843
        %v845 = vpack.c.bf16 %v844, %v844
        %846 = vrot.lane.b32.xlu0 %v783, 56
        %v847 = vpop.permute.xlu0 %846
        %v849 = vsel %vm669, %v845, 0
        %v852 = vsel %vm733, %v847, 0
        %854 = vmatprep.subr.bf16.mxu0 0
        %855 = vmatpush1.bf16.msra.mxu0 %v852
        %856 = vmatprep.subr.bf16.mxu0 0
        %857 = vmatpush1.bf16.msra.mxu0 0
        %858 = vmatprep.subr.bf16.mxu0 0
        %859 = vmatpush1.bf16.msra.mxu0 0
        %860 = vmatprep.subr.bf16.mxu0 0
        %861 = vmatpush1.bf16.msra.mxu0 0
        %862 = vmatprep.subr.bf16.mxu0 0
        %863 = vmatpush1.bf16.msra.mxu0 0
        %864 = vmatprep.subr.bf16.mxu0 0
        %865 = vmatpush1.bf16.msra.mxu0 0
        %866 = vmatprep.subr.bf16.mxu0 0
        %867 = vmatpush1.bf16.msra.mxu0 0
        %868 = vmatprep.subr.bf16.mxu0 0
        %869 = vmatpush1.bf16.msra.mxu0 0
        %870 = vmatprep.subr.bf16.mxu0 0
        %871 = vmatpush1.bf16.msra.mxu0 0
        %872 = vmatprep.subr.bf16.mxu0 0
        %873 = vmatpush1.bf16.msra.mxu0 0
        %874 = vmatprep.subr.bf16.mxu0 0
        %875 = vmatpush1.bf16.msra.mxu0 0
        %876 = vmatprep.subr.bf16.mxu0 0
        %877 = vmatpush1.bf16.msra.mxu0 0
        %878 = vmatprep.subr.bf16.mxu0 0
        %879 = vmatpush1.bf16.msra.mxu0 0
        %880 = vmatprep.subr.bf16.mxu0 0
        %881 = vmatpush1.bf16.msra.mxu0 0
        %882 = vmatprep.subr.bf16.mxu0 0
        %883 = vmatpush1.bf16.msra.mxu0 0
        %884 = vmatprep.subr.bf16.mxu0 0
        %885 = vmatpush1.bf16.msra.mxu0 0
        %886 = vmatprep.mubr.bf16.mxu0 0
        %887 = vmatmul.mubr.bf16.gmra.mrb[0].mxu0 %v849
        %v888 = vpop.f32.mrb[0].mxu0
        %v889 = vadd.f32 0.0, %v888
        %v890 = vpop.f32.mrb[0].mxu0
        %v891 = vpop.f32.mrb[0].mxu0
        %v892 = vpop.f32.mrb[0].mxu0
        %893 = vdwg.mxu0
        %v894 = vpack.c.bf16 %v889, %v889
        %v896 = vunpack.c.l.b16 %v894
        %v897 = vpack.c.b16 %v896, %v896
        %898 = vrot.lane.b32.xlu0 %v897, 8
        %v899 = vpop.permute.xlu0 %898
        %vm901 = vcmask 126016
        %902 = vst.msk [vmem:[#allocation3] sm:$0xf] %vm901, %v899
        %v903 = vld [vmem:[#allocation2] sm:$0xf]
        %v905 = vunpack.c.l.b16 %v903
        %v906 = vpack.c.b16 %v905, %v905
        %907 = vrot.lane.b32.xlu0 %v906, 112
        %v908 = vpop.permute.xlu0 %907
        %909 = vrot.lane.b32.xlu0 %v906, 80
        %v910 = vpop.permute.xlu0 %909
        %v912 = vsel %vm669, %v908, 0
        %v915 = vsel %vm669, %v910, 0
        %917 = vmatprep.subr.bf16.mxu0 0
        %918 = vmatpush1.bf16.xpose.msra.mxu0 %v915
        %919 = vmatprep.subr.bf16.mxu0 0
        %920 = vmatpush1.bf16.xpose.msra.mxu0 0
        %921 = vmatprep.subr.bf16.mxu0 0
        %922 = vmatpush1.bf16.xpose.msra.mxu0 0
        %923 = vmatprep.subr.bf16.mxu0 0
        %924 = vmatpush1.bf16.xpose.msra.mxu0 0
        %925 = vmatprep.subr.bf16.mxu0 0
        %926 = vmatpush1.bf16.xpose.msra.mxu0 0
        %927 = vmatprep.subr.bf16.mxu0 0
        %928 = vmatpush1.bf16.xpose.msra.mxu0 0
        %929 = vmatprep.subr.bf16.mxu0 0
        %930 = vmatpush1.bf16.xpose.msra.mxu0 0
        %931 = vmatprep.subr.bf16.mxu0 0
        %932 = vmatpush1.bf16.xpose.msra.mxu0 0
        %933 = vmatprep.subr.bf16.mxu0 0
        %934 = vmatpush1.bf16.xpose.msra.mxu0 0
        %935 = vmatprep.subr.bf16.mxu0 0
        %936 = vmatpush1.bf16.xpose.msra.mxu0 0
        %937 = vmatprep.subr.bf16.mxu0 0
        %938 = vmatpush1.bf16.xpose.msra.mxu0 0
        %939 = vmatprep.subr.bf16.mxu0 0
        %940 = vmatpush1.bf16.xpose.msra.mxu0 0
        %941 = vmatprep.subr.bf16.mxu0 0
        %942 = vmatpush1.bf16.xpose.msra.mxu0 0
        %943 = vmatprep.subr.bf16.mxu0 0
        %944 = vmatpush1.bf16.xpose.msra.mxu0 0
        %945 = vmatprep.subr.bf16.mxu0 0
        %946 = vmatpush1.bf16.xpose.msra.mxu0 0
        %947 = vmatprep.subr.bf16.mxu0 0
        %948 = vmatpush1.bf16.xpose.msra.mxu0 0
        %949 = vmatprep.mubr.bf16.mxu0 0
        %950 = vmatmul.mubr.bf16.gmra.mrb[0].mxu0 %v912
        %v951 = vpop.f32.mrb[0].mxu0
        %v952 = vadd.f32 0.0, %v951
        %v953 = vpop.f32.mrb[0].mxu0
        %v954 = vpop.f32.mrb[0].mxu0
        %v955 = vpop.f32.mrb[0].mxu0
        %956 = vdwg.mxu0
        %v957 = vsel %vm669, %v952, -inf
        %958 = vmax.xlane.f32.xlu0 %v957
        %v959 = vpop.xlane.xlu0 %958
        %v960 = vsub.f32 %v952, %v959
        %v961 = vmul.f32 %v960, 1.442695
        %v962 = vpow.pop %v961
        %v963 = vsel %vm669, %v962, 0.0
        %964 = vadd.xlane.f32.xlu0 %v963
        %v965 = vpop.xlane.xlu0 %964
        %v966 = vrcp.pop %v965
        %v967 = vmul.f32 %v962, %v966
        %v968 = vpack.c.bf16 %v967, %v967
        %969 = vrot.lane.b32.xlu0 %v906, 48
        %v970 = vpop.permute.xlu0 %969
        %v972 = vsel %vm669, %v968, 0
        %v975 = vsel %vm733, %v970, 0
        %977 = vmatprep.subr.bf16.mxu0 0
        %978 = vmatpush1.bf16.msra.mxu0 %v975
        %979 = vmatprep.subr.bf16.mxu0 0
        %980 = vmatpush1.bf16.msra.mxu0 0
        %981 = vmatprep.subr.bf16.mxu0 0
        %982 = vmatpush1.bf16.msra.mxu0 0
        %983 = vmatprep.subr.bf16.mxu0 0
        %984 = vmatpush1.bf16.msra.mxu0 0
        %985 = vmatprep.subr.bf16.mxu0 0
        %986 = vmatpush1.bf16.msra.mxu0 0
        %987 = vmatprep.subr.bf16.mxu0 0
        %988 = vmatpush1.bf16.msra.mxu0 0
        %989 = vmatprep.subr.bf16.mxu0 0
        %990 = vmatpush1.bf16.msra.mxu0 0
        %991 = vmatprep.subr.bf16.mxu0 0
        %992 = vmatpush1.bf16.msra.mxu0 0
        %993 = vmatprep.subr.bf16.mxu0 0
        %994 = vmatpush1.bf16.msra.mxu0 0
        %995 = vmatprep.subr.bf16.mxu0 0
        %996 = vmatpush1.bf16.msra.mxu0 0
        %997 = vmatprep.subr.bf16.mxu0 0
        %998 = vmatpush1.bf16.msra.mxu0 0
        %999 = vmatprep.subr.bf16.mxu0 0
        %1000 = vmatpush1.bf16.msra.mxu0 0
        %1001 = vmatprep.subr.bf16.mxu0 0
        %1002 = vmatpush1.bf16.msra.mxu0 0
        %1003 = vmatprep.subr.bf16.mxu0 0
        %1004 = vmatpush1.bf16.msra.mxu0 0
        %1005 = vmatprep.subr.bf16.mxu0 0
        %1006 = vmatpush1.bf16.msra.mxu0 0
        %1007 = vmatprep.subr.bf16.mxu0 0
        %1008 = vmatpush1.bf16.msra.mxu0 0
        %1009 = vmatprep.mubr.bf16.mxu0 0
        %1010 = vmatmul.mubr.bf16.gmra.mrb[0].mxu0 %v972
        %v1011 = vpop.f32.mrb[0].mxu0
        %v1012 = vadd.f32 0.0, %v1011
        %v1013 = vpop.f32.mrb[0].mxu0
        %v1014 = vpop.f32.mrb[0].mxu0
        %v1015 = vpop.f32.mrb[0].mxu0
        %1016 = vdwg.mxu0
        %v1017 = vpack.c.bf16 %v1012, %v1012
        %v1019 = vunpack.c.l.b16 %v1017
        %v1020 = vpack.c.b16 %v1019, %v1019
        %1021 = vrot.lane.b32.xlu0 %v1020, 16
        %v1022 = vpop.permute.xlu0 %1021
        %vm1024 = vcmask 191616
        %1025 = vst.msk [vmem:[#allocation3] sm:$0xf] %vm1024, %v1022
        %v1026 = vld [vmem:[#allocation2] sm:$0xf]
        %v1028 = vunpack.c.l.b16 %v1026
        %v1029 = vpack.c.b16 %v1028, %v1028
        %1030 = vrot.lane.b32.xlu0 %v1029, 104
        %v1031 = vpop.permute.xlu0 %1030
        %1032 = vrot.lane.b32.xlu0 %v1029, 72
        %v1033 = vpop.permute.xlu0 %1032
        %v1035 = vsel %vm669, %v1031, 0
        %v1038 = vsel %vm669, %v1033, 0
        %1040 = vmatprep.subr.bf16.mxu0 0
        %1041 = vmatpush1.bf16.xpose.msra.mxu0 %v1038
        %1042 = vmatprep.subr.bf16.mxu0 0
        %1043 = vmatpush1.bf16.xpose.msra.mxu0 0
        %1044 = vmatprep.subr.bf16.mxu0 0
        %1045 = vmatpush1.bf16.xpose.msra.mxu0 0
        %1046 = vmatprep.subr.bf16.mxu0 0
        %1047 = vmatpush1.bf16.xpose.msra.mxu0 0
        %1048 = vmatprep.subr.bf16.mxu0 0
        %1049 = vmatpush1.bf16.xpose.msra.mxu0 0
        %1050 = vmatprep.subr.bf16.mxu0 0
        %1051 = vmatpush1.bf16.xpose.msra.mxu0 0
        %1052 = vmatprep.subr.bf16.mxu0 0
        %1053 = vmatpush1.bf16.xpose.msra.mxu0 0
        %1054 = vmatprep.subr.bf16.mxu0 0
        %1055 = vmatpush1.bf16.xpose.msra.mxu0 0
        %1056 = vmatprep.subr.bf16.mxu0 0
        %1057 = vmatpush1.bf16.xpose.msra.mxu0 0
        %1058 = vmatprep.subr.bf16.mxu0 0
        %1059 = vmatpush1.bf16.xpose.msra.mxu0 0
        %1060 = vmatprep.subr.bf16.mxu0 0
        %1061 = vmatpush1.bf16.xpose.msra.mxu0 0
        %1062 = vmatprep.subr.bf16.mxu0 0
        %1063 = vmatpush1.bf16.xpose.msra.mxu0 0
        %1064 = vmatprep.subr.bf16.mxu0 0
        %1065 = vmatpush1.bf16.xpose.msra.mxu0 0
        %1066 = vmatprep.subr.bf16.mxu0 0
        %1067 = vmatpush1.bf16.xpose.msra.mxu0 0
        %1068 = vmatprep.subr.bf16.mxu0 0
        %1069 = vmatpush1.bf16.xpose.msra.mxu0 0
        %1070 = vmatprep.subr.bf16.mxu0 0
        %1071 = vmatpush1.bf16.xpose.msra.mxu0 0
        %1072 = vmatprep.mubr.bf16.mxu0 0
        %1073 = vmatmul.mubr.bf16.gmra.mrb[0].mxu0 %v1035
        %v1074 = vpop.f32.mrb[0].mxu0
        %v1075 = vadd.f32 0.0, %v1074
        %v1076 = vpop.f32.mrb[0].mxu0
        %v1077 = vpop.f32.mrb[0].mxu0
        %v1078 = vpop.f32.mrb[0].mxu0
        %1079 = vdwg.mxu0
        %v1080 = vsel %vm669, %v1075, -inf
        %1081 = vmax.xlane.f32.xlu0 %v1080
        %v1082 = vpop.xlane.xlu0 %1081
        %v1083 = vsub.f32 %v1075, %v1082
        %v1084 = vmul.f32 %v1083, 1.442695
        %v1085 = vpow.pop %v1084
        %v1086 = vsel %vm669, %v1085, 0.0
        %1087 = vadd.xlane.f32.xlu0 %v1086
        %v1088 = vpop.xlane.xlu0 %1087
        %v1089 = vrcp.pop %v1088
        %v1090 = vmul.f32 %v1085, %v1089
        %v1091 = vpack.c.bf16 %v1090, %v1090
        %1092 = vrot.lane.b32.xlu0 %v1029, 40
        %v1093 = vpop.permute.xlu0 %1092
        %v1095 = vsel %vm669, %v1091, 0
        %v1098 = vsel %vm733, %v1093, 0
        %1100 = vmatprep.subr.bf16.mxu0 0
        %1101 = vmatpush1.bf16.msra.mxu0 %v1098
        %1102 = vmatprep.subr.bf16.mxu0 0
        %1103 = vmatpush1.bf16.msra.mxu0 0
        %1104 = vmatprep.subr.bf16.mxu0 0
        %1105 = vmatpush1.bf16.msra.mxu0 0
        %1106 = vmatprep.subr.bf16.mxu0 0
        %1107 = vmatpush1.bf16.msra.mxu0 0
        %1108 = vmatprep.subr.bf16.mxu0 0
        %1109 = vmatpush1.bf16.msra.mxu0 0
        %1110 = vmatprep.subr.bf16.mxu0 0
        %1111 = vmatpush1.bf16.msra.mxu0 0
        %1112 = vmatprep.subr.bf16.mxu0 0
        %1113 = vmatpush1.bf16.msra.mxu0 0
        %1114 = vmatprep.subr.bf16.mxu0 0
        %1115 = vmatpush1.bf16.msra.mxu0 0
        %1116 = vmatprep.subr.bf16.mxu0 0
        %1117 = vmatpush1.bf16.msra.mxu0 0
        %1118 = vmatprep.subr.bf16.mxu0 0
        %1119 = vmatpush1.bf16.msra.mxu0 0
        %1120 = vmatprep.subr.bf16.mxu0 0
        %1121 = vmatpush1.bf16.msra.mxu0 0
        %1122 = vmatprep.subr.bf16.mxu0 0
        %1123 = vmatpush1.bf16.msra.mxu0 0
        %1124 = vmatprep.subr.bf16.mxu0 0
        %1125 = vmatpush1.bf16.msra.mxu0 0
        %1126 = vmatprep.subr.bf16.mxu0 0
        %1127 = vmatpush1.bf16.msra.mxu0 0
        %1128 = vmatprep.subr.bf16.mxu0 0
        %1129 = vmatpush1.bf16.msra.mxu0 0
        %1130 = vmatprep.subr.bf16.mxu0 0
        %1131 = vmatpush1.bf16.msra.mxu0 0
        %1132 = vmatprep.mubr.bf16.mxu0 0
        %1133 = vmatmul.mubr.bf16.gmra.mrb[0].mxu0 %v1095
        %v1134 = vpop.f32.mrb[0].mxu0
        %v1135 = vadd.f32 0.0, %v1134
        %v1136 = vpop.f32.mrb[0].mxu0
        %v1137 = vpop.f32.mrb[0].mxu0
        %v1138 = vpop.f32.mrb[0].mxu0
        %1139 = vdwg.mxu0
        %v1140 = vpack.c.bf16 %v1135, %v1135
        %v1142 = vunpack.c.l.b16 %v1140
        %v1143 = vpack.c.b16 %v1142, %v1142
        %1144 = vrot.lane.b32.xlu0 %v1143, 24
        %v1145 = vpop.permute.xlu0 %1144
        %vm1147 = vcmask 257216
        %1148 = vst.msk [vmem:[#allocation3] sm:$0xf] %vm1147, %v1145
        %v1149 = vld [vmem:[#allocation3] sm:$0xf]
        %v1150 = vld [vmem:[%s5] sm:$0xf]
        %v1151 = vld [vmem:[%s5 + $0x4] sm:$0xf]
        %v1152 = vld [vmem:[%s5 + $0x8] sm:$0xf]
        %v1153 = vld [vmem:[%s5 + $0xc] sm:$0xf]
        %v1155 = vlaneseq
        %v1156 = vshrl.u32 %v1155, 7
        %v1157 = vsub.s32 0, %v1156
        %v1158 = vrot.slane %v561, %v1157
        %v1164 = vunpack.c.l.b16 %v1150
        %v1165 = vunpack.c.l.b16 %v1151
        %v1166 = vunpack.c.l.b16 %v1152
        %v1167 = vunpack.c.l.b16 %v1153
        %v1168 = vpack.c.b16 %v1165, %v1164
        %v1169 = vpack.c.b16 %v1167, %v1166
        %v1173 = vsel %vm565, %v1149, 0
        %1175 = vmatprep.subr.bf16.mxu0 0
        %1176 = vmatpush1.bf16.msra.mxu0 %v1168
        %1177 = vmatprep.subr.bf16.mxu0 0
        %1178 = vmatpush1.bf16.msra.mxu0 %v1169
        %1179 = vmatprep.subr.bf16.mxu0 0
        %1180 = vmatpush1.bf16.msra.mxu0 0
        %1181 = vmatprep.subr.bf16.mxu0 0
        %1182 = vmatpush1.bf16.msra.mxu0 0
        %1183 = vmatprep.subr.bf16.mxu0 0
        %1184 = vmatpush1.bf16.msra.mxu0 0
        %1185 = vmatprep.subr.bf16.mxu0 0
        %1186 = vmatpush1.bf16.msra.mxu0 0
        %1187 = vmatprep.subr.bf16.mxu0 0
        %1188 = vmatpush1.bf16.msra.mxu0 0
        %1189 = vmatprep.subr.bf16.mxu0 0
        %1190 = vmatpush1.bf16.msra.mxu0 0
        %1191 = vmatprep.subr.bf16.mxu0 0
        %1192 = vmatpush1.bf16.msra.mxu0 0
        %1193 = vmatprep.subr.bf16.mxu0 0
        %1194 = vmatpush1.bf16.msra.mxu0 0
        %1195 = vmatprep.subr.bf16.mxu0 0
        %1196 = vmatpush1.bf16.msra.mxu0 0
        %1197 = vmatprep.subr.bf16.mxu0 0
        %1198 = vmatpush1.bf16.msra.mxu0 0
        %1199 = vmatprep.subr.bf16.mxu0 0
        %1200 = vmatpush1.bf16.msra.mxu0 0
        %1201 = vmatprep.subr.bf16.mxu0 0
        %1202 = vmatpush1.bf16.msra.mxu0 0
        %1203 = vmatprep.subr.bf16.mxu0 0
        %1204 = vmatpush1.bf16.msra.mxu0 0
        %1205 = vmatprep.subr.bf16.mxu0 0
        %1206 = vmatpush1.bf16.msra.mxu0 0
        %1207 = vmatprep.mubr.bf16.mxu0 0
        %1208 = vmatmul.mubr.bf16.gmra.mrb[0].mxu0 %v1173
        %v1209 = vpop.f32.mrb[0].mxu0
        %v1210 = vadd.f32 %v1158, %v1209
        %v1211 = vpop.f32.mrb[0].mxu0
        %v1212 = vpop.f32.mrb[0].mxu0
        %v1213 = vpop.f32.mrb[0].mxu0
        %1214 = vdwg.mxu0
        %v1215 = vadd.f32 %v1210, %v564
        %v1216 = vsel %vm565, %v1215, 0.0
        %1217 = vadd.xlane.f32.xlu0 %v1216
        %v1218 = vpop.xlane.xlu0 %1217
        %v1219 = vmul.f32 %v1218, %v569
        %v1220 = vsub.f32 %v1215, %v1219
        %v1221 = vmul.f32 %v1220, %v1220
        %v1222 = vsel %vm565, %v1221, 0.0
        %1223 = vadd.xlane.f32.xlu0 %v1222
        %v1224 = vpop.xlane.xlu0 %1223
        %v1225 = vmul.f32 %v1224, %v569
        %v1226 = vadd.f32 %v1225, 1e-12
        %v1227 = vrsqrt.pop %v1226
        %v1228 = vmul.f32 %v1220, %v1227
        %v1230 = vlaneseq
        %v1231 = vshrl.u32 %v1230, 7
        %v1232 = vsub.s32 0, %v1231
        %v1233 = vrot.slane %v556, %v1232
        %v1235 = vmul.f32 %v1228, %v1233
        %v1237 = vlaneseq
        %v1238 = vshrl.u32 %v1237, 7
        %v1239 = vsub.s32 0, %v1238
        %v1240 = vrot.slane %v557, %v1239
        %v1242 = vadd.f32 %v1235, %v1240
        %v1243 = vsel %vm565, %v1242, 0.0
        %1244 = vadd.xlane.f32.xlu0 %v1243
        %v1245 = vpop.xlane.xlu0 %1244
        %v1246 = vmul.f32 %v1245, %v569
        %v1247 = vsub.f32 %v1242, %v1246
        %v1248 = vmul.f32 %v1247, %v1247
        %v1249 = vsel %vm565, %v1248, 0.0
        %1250 = vadd.xlane.f32.xlu0 %v1249
        %v1251 = vpop.xlane.xlu0 %1250
        %v1252 = vmul.f32 %v1251, %v569
        %v1253 = vadd.f32 %v1252, 1e-12
        %v1254 = vrsqrt.pop %v1253
        %v1255 = vmul.f32 %v1247, %v1254
        %v1257 = vlaneseq
        %v1258 = vshrl.u32 %v1257, 7
        %v1259 = vsub.s32 0, %v1258
        %v1260 = vrot.slane %v558, %v1259
        %v1262 = vmul.f32 %v1255, %v1260
        %v1264 = vlaneseq
        %v1265 = vshrl.u32 %v1264, 7
        %v1266 = vsub.s32 0, %v1265
        %v1267 = vrot.slane %v559, %v1266
        %v1269 = vadd.f32 %v1262, %v1267
        %v1270 = vpack.c.bf16 %v1269, %v1269
        %v1271 = vld [vmem:[%s11] sm:$0xf]
        %v1272 = vld [vmem:[%s11 + $0x4] sm:$0xf]
        %v1273 = vld [vmem:[%s11 + $0x8] sm:$0xf]
        %v1274 = vld [vmem:[%s11 + $0xc] sm:$0xf]
        %v1276 = vlaneseq
        %v1277 = vshrl.u32 %v1276, 7
        %v1278 = vsub.s32 0, %v1277
        %v1279 = vrot.slane %v562, %v1278
        %v1285 = vunpack.c.l.b16 %v1271
        %v1286 = vunpack.c.l.b16 %v1272
        %v1287 = vunpack.c.l.b16 %v1273
        %v1288 = vunpack.c.l.b16 %v1274
        %v1289 = vpack.c.b16 %v1286, %v1285
        %v1290 = vpack.c.b16 %v1288, %v1287
        %v1294 = vsel %vm565, %v1270, 0
        %1296 = vmatprep.subr.bf16.mxu0 0
        %1297 = vmatpush1.bf16.msra.mxu0 %v1289
        %1298 = vmatprep.subr.bf16.mxu0 0
        %1299 = vmatpush1.bf16.msra.mxu0 %v1290
        %1300 = vmatprep.subr.bf16.mxu0 0
        %1301 = vmatpush1.bf16.msra.mxu0 0
        %1302 = vmatprep.subr.bf16.mxu0 0
        %1303 = vmatpush1.bf16.msra.mxu0 0
        %1304 = vmatprep.subr.bf16.mxu0 0
        %1305 = vmatpush1.bf16.msra.mxu0 0
        %1306 = vmatprep.subr.bf16.mxu0 0
        %1307 = vmatpush1.bf16.msra.mxu0 0
        %1308 = vmatprep.subr.bf16.mxu0 0
        %1309 = vmatpush1.bf16.msra.mxu0 0
        %1310 = vmatprep.subr.bf16.mxu0 0
        %1311 = vmatpush1.bf16.msra.mxu0 0
        %1312 = vmatprep.subr.bf16.mxu0 0
        %1313 = vmatpush1.bf16.msra.mxu0 0
        %1314 = vmatprep.subr.bf16.mxu0 0
        %1315 = vmatpush1.bf16.msra.mxu0 0
        %1316 = vmatprep.subr.bf16.mxu0 0
        %1317 = vmatpush1.bf16.msra.mxu0 0
        %1318 = vmatprep.subr.bf16.mxu0 0
        %1319 = vmatpush1.bf16.msra.mxu0 0
        %1320 = vmatprep.subr.bf16.mxu0 0
        %1321 = vmatpush1.bf16.msra.mxu0 0
        %1322 = vmatprep.subr.bf16.mxu0 0
        %1323 = vmatpush1.bf16.msra.mxu0 0
        %1324 = vmatprep.subr.bf16.mxu0 0
        %1325 = vmatpush1.bf16.msra.mxu0 0
        %1326 = vmatprep.subr.bf16.mxu0 0
        %1327 = vmatpush1.bf16.msra.mxu0 0
        %1328 = vmatprep.mubr.bf16.mxu0 0
        %1329 = vmatmul.mubr.bf16.gmra.mrb[0].mxu0 %v1294
        %v1330 = vpop.f32.mrb[0].mxu0
        %v1331 = vadd.f32 %v1279, %v1330
        %v1332 = vpop.f32.mrb[0].mxu0
        %v1333 = vpop.f32.mrb[0].mxu0
        %v1334 = vpop.f32.mrb[0].mxu0
        %1335 = vdwg.mxu0
        %v1336 = vmul.f32 %v1331, 0.5
        %v1337 = vmul.f32 %v1331, 0.70710677
        %v1338 = verf.f32.pop %v1337
        %v1339 = vadd.f32 %v1338, 1.0
        %v1340 = vmul.f32 %v1336, %v1339
        %v1341 = vpack.c.bf16 %v1340, %v1340
        %v1342 = vld [vmem:[%s13] sm:$0xf]
        %v1343 = vld [vmem:[%s13 + $0x4] sm:$0xf]
        %v1344 = vld [vmem:[%s13 + $0x8] sm:$0xf]
        %v1345 = vld [vmem:[%s13 + $0xc] sm:$0xf]
        %v1346 = vld [vmem:[%s13 + $0x10] sm:$0xf]
        %v1347 = vld [vmem:[%s13 + $0x14] sm:$0xf]
        %v1348 = vld [vmem:[%s13 + $0x18] sm:$0xf]
        %v1349 = vld [vmem:[%s13 + $0x1c] sm:$0xf]
        %v1351 = vlaneseq
        %v1352 = vshrl.u32 %v1351, 7
        %v1353 = vsub.s32 0, %v1352
        %v1354 = vrot.slane %v563, %v1353
        %v1364 = vunpack.c.l.b16 %v1342
        %v1365 = vunpack.c.l.b16 %v1343
        %v1366 = vunpack.c.l.b16 %v1344
        %v1367 = vunpack.c.l.b16 %v1345
        %v1368 = vunpack.c.l.b16 %v1346
        %v1369 = vunpack.c.l.b16 %v1347
        %v1370 = vunpack.c.l.b16 %v1348
        %v1371 = vunpack.c.l.b16 %v1349
        %v1372 = vpack.c.b16 %v1365, %v1364
        %v1373 = vpack.c.b16 %v1367, %v1366
        %v1374 = vpack.c.b16 %v1369, %v1368
        %v1375 = vpack.c.b16 %v1371, %v1370
        %vm1380 = vcmask 523264
        %v1382 = vsel %vm1380, %v1341, 0
        %1384 = vmatprep.subr.bf16.mxu0 0
        %1385 = vmatpush1.bf16.msra.mxu0 %v1372
        %1386 = vmatprep.subr.bf16.mxu0 0
        %1387 = vmatpush1.bf16.msra.mxu0 %v1373
        %1388 = vmatprep.subr.bf16.mxu0 0
        %1389 = vmatpush1.bf16.msra.mxu0 %v1374
        %1390 = vmatprep.subr.bf16.mxu0 0
        %1391 = vmatpush1.bf16.msra.mxu0 %v1375
        %1392 = vmatprep.subr.bf16.mxu0 0
        %1393 = vmatpush1.bf16.msra.mxu0 0
        %1394 = vmatprep.subr.bf16.mxu0 0
        %1395 = vmatpush1.bf16.msra.mxu0 0
        %1396 = vmatprep.subr.bf16.mxu0 0
        %1397 = vmatpush1.bf16.msra.mxu0 0
        %1398 = vmatprep.subr.bf16.mxu0 0
        %1399 = vmatpush1.bf16.msra.mxu0 0
        %1400 = vmatprep.subr.bf16.mxu0 0
        %1401 = vmatpush1.bf16.msra.mxu0 0
        %1402 = vmatprep.subr.bf16.mxu0 0
        %1403 = vmatpush1.bf16.msra.mxu0 0
        %1404 = vmatprep.subr.bf16.mxu0 0
        %1405 = vmatpush1.bf16.msra.mxu0 0
        %1406 = vmatprep.subr.bf16.mxu0 0
        %1407 = vmatpush1.bf16.msra.mxu0 0
        %1408 = vmatprep.subr.bf16.mxu0 0
        %1409 = vmatpush1.bf16.msra.mxu0 0
        %1410 = vmatprep.subr.bf16.mxu0 0
        %1411 = vmatpush1.bf16.msra.mxu0 0
        %1412 = vmatprep.subr.bf16.mxu0 0
        %1413 = vmatpush1.bf16.msra.mxu0 0
        %1414 = vmatprep.subr.bf16.mxu0 0
        %1415 = vmatpush1.bf16.msra.mxu0 0
        %1416 = vmatprep.mubr.bf16.mxu0 0
        %1417 = vmatmul.mubr.bf16.gmra.mrb[0].mxu0 %v1382
        %v1418 = vpop.f32.mrb[0].mxu0
        %v1419 = vadd.f32 %v1354, %v1418
        %v1420 = vpop.f32.mrb[0].mxu0
        %v1421 = vpop.f32.mrb[0].mxu0
        %v1422 = vpop.f32.mrb[0].mxu0
        %1423 = vdwg.mxu0
        %v1424 = vadd.f32 %v1419, %v1215
        %1425 = vst.msk [vmem:[%s548] sm:$0xff] %vm565, %v1424
        %s1426 = sand.u32 %s360, 1
        %s1427 = scalar_lea.sflag [#allocation6], %s1426
        %s1428 = sand.u32 %s360, 1
        %s1429 = smul.addr %s1428, 8
        %s1430 = scalar_lea.vmem [#allocation13], %s1429
        // Predicated region
        $region101: #{tpu_custom_call.1} parent=79 // pred_check
          %p1431 = pneg %p370
        $region102: #{tpu_custom_call.1} parent=79 // pred_check_branch
          %1433 = sbr.rel (%p1431) target = $region104
        $region103: #{tpu_custom_call.1} parent=79 // pred_region
          %s1435 = ssub.s32 128, 128
          %1436 = vsyncadd %s1427, %s1435
          %s1437 = smul.addr %s32, 128
          %s1438 = scalar_lea.hbm %s15, %s1437
          %s1440 = sshll.u32 %s1430, 4
          %s1441 = int_to_ptr.vmem [resolvable:$true] %s1440
          %1443 = dma.vmem_to_hbm [thread:$0]  %s1441, 128, %s1438, %s1427
        $region104: #{tpu_custom_call.1} parent=79 // pred_fallthru
          _
      $region80: #{tpu_custom_call.1} parent=5 // pred_fallthru
        _
      %p1444 = scmp.le.s32.totalorder 2, %s27
      // Predicated region
      $region105: #{tpu_custom_call.1} parent=5 // pred_check
        %p1445 = pneg %p1444
      $region106: #{tpu_custom_call.1} parent=5 // pred_check_branch
        %1447 = sbr.rel (%p1445) target = $region108
      $region107: #{tpu_custom_call.1} parent=5 // pred_region
        %s1448 = ssub.s32 %s27, 2
        // Predicated region
        $region109: #{tpu_custom_call.1} parent=107 // pred_check
          %p1449 = pneg %p376
        $region110: #{tpu_custom_call.1} parent=107 // pred_check_branch
          %1451 = sbr.rel (%p1449) target = $region112
        $region111: #{tpu_custom_call.1} parent=107 // pred_region
          %s1452 = sand.u32 %s361, 1
          %s1453 = scalar_lea.sflag [#allocation6], %s1452
          %s1454 = sand.u32 %s361, 1
          %s1455 = smul.addr %s1454, 8
          %s1456 = scalar_lea.vmem [#allocation13], %s1455
          %1457 = dma.done %s1453, 128
        $region112: #{tpu_custom_call.1} parent=107 // pred_fallthru
          _
      $region108: #{tpu_custom_call.1} parent=5 // pred_fallthru
        _
    $region6: #{tpu_custom_call.1} parent=1 // loop_footer
      %s31 = sadd.s32 1, %s27
    $region7: #{tpu_custom_call.1} parent=1 // loop_footer_branch
      %26 = sbr.rel target = $region3
    $region8: #{tpu_custom_call.1} parent=1 // loop_exit
      _
    %1458 = vsyncpa [#allocation5], 1
    %s1459 = scalar_lea.sflag [#allocation5], 1
    %1460 = vsyncpa %s1459, 1
    %1461 = vsyncpa [#allocation8], 1
    %1462 = vsyncpa [#allocation11], 1
    %1463 = vsyncpa [#allocation6], 1
    %s1464 = scalar_lea.sflag [#allocation6], 1
    %1465 = vsyncpa %s1464, 1

</llo_original>
